<compile_context>
chip_gen: v7x
topology: tpu7x:2x2x1
jax: 0.10.0
libtpu: 0.0.40
codegen_flags: <defaults>
</compile_context>

<pallas_src>
import functools
import math

import jax
import jax.numpy as jnp
from jax import lax
from jax.experimental import pallas as pl
from jax.experimental.pallas import tpu as pltpu  # noqa: F401  (TPU backend)


def mhattn_kernel(x_ref,                     # (B*L, 1)  flattened input scalars
                  wq_ref, bq_ref,            # (1, D)  emb->Q fused, scale folded
                  wk_ref, bk_ref,            # (1, D)  emb->K fused
                  wv_ref, bv_ref,            # (1, D)  emb->V fused
                  mask_ref,                  # (B*L, B*L) additive block-diag mask
                  pmat_ref,                  # (B, B*L) per-batch mean-pooling matrix
                  wo_ref, bo_ref,            # (D, D), (1, D)
                  w1_ref, b1_ref,            # (D, H), (1, H)
                  w2t_ref, b2_ref,           # (1, H), (1, 1)   fc2 weight pre-transposed
                  out_ref,                   # (B, 1)
                  hm_ref,                    # (L, L)
                  *, num_heads, batch, seq_len):
    d_model = wo_ref.shape[0]
    head_dim = d_model // num_heads
    bl = batch * seq_len

    x = x_ref[...]                                        # (BL, 1)
    # Rank-1 embedding folded into the projections -> VPU only, no MXU push.
    q = x * wq_ref[...] + bq_ref[...]                     # (BL, D), already scaled
    k = x * wk_ref[...] + bk_ref[...]                     # (BL, D)
    v = x * wv_ref[...] + bv_ref[...]                     # (BL, D)

    mask_add = mask_ref[...]                              # 0 within batch, -1e30 across
    pmat = pmat_ref[...]                                  # (B, BL), 1/L block structure

    p_sum = jnp.zeros((bl, bl), jnp.float32)
    pooled_heads = []
    for h in range(num_heads):                            # static, unrolled (4 iters)
        c0 = h * head_dim
        qh = q[:, c0:c0 + head_dim]
        kh = k[:, c0:c0 + head_dim]
        vh = v[:, c0:c0 + head_dim]
        # One wide score matmul over the whole batch; cross-batch blocks masked
        # off BEFORE the row max so they end up with exactly zero probability.
        s = lax.dot_general(qh, kh, (((1,), (1,)), ((), ())),
                            preferred_element_type=jnp.float32) + mask_add  # (BL, BL)
        s = s - jnp.max(s, axis=-1, keepdims=True)
        p = jnp.exp(s)                                    # masked entries underflow to 0
        p = p / jnp.sum(p, axis=-1, keepdims=True)        # exact divide (ref parity)
        p_sum = p_sum + p
        # Commute the sequence mean past PV:  mean_L(p @ v) = (Pmat @ p) @ v.
        pooled_p = jnp.dot(pmat, p, preferred_element_type=jnp.float32)     # (B, BL)
        pooled_heads.append(jnp.dot(pooled_p, vh,
                                    preferred_element_type=jnp.float32))    # (B, hd)

    pooled = jnp.concatenate(pooled_heads, axis=-1)                         # (B, D)
    # Output projection applied ONCE to the pooled tensor (mean commutes with Wo).
    attn_pooled = jnp.dot(pooled, wo_ref[...],
                          preferred_element_type=jnp.float32) + bo_ref[...]  # (B, D)

    # ----- MLP head -----
    h1 = jnp.tanh(jnp.dot(attn_pooled, w1_ref[...],
                          preferred_element_type=jnp.float32) + b1_ref[...])
    # TODO(synk): dropout is identity here (inference semantics).
    out_ref[...] = jnp.sum(h1 * w2t_ref[...], axis=-1,
                           keepdims=True) + b2_ref[...]                      # (B, 1)

    # ----- heatmap: mean over heads & batch of per-batch attention -----
    # Off-diagonal blocks of p_sum are exactly zero (masked), so summing the
    # diagonal (L, L) blocks gives sum over batch of the per-batch attention.
    hm = p_sum[0:seq_len, 0:seq_len]
    for b in range(1, batch):                             # static, unrolled
        r0 = b * seq_len
        hm = hm + p_sum[r0:r0 + seq_len, r0:r0 + seq_len]
    hm_ref[...] = hm * (1.0 / (batch * num_heads))


def mhattn_regressor_forward(x, params, *, num_heads):
    B, L = x.shape
    D = params["w_emb"].shape[-1]
    head_dim = D // num_heads
    scale = 1.0 / math.sqrt(head_dim)

    x_col = x.reshape(B * L, 1).astype(jnp.float32)

    # Fold the rank-1 embedding (Linear(1, D)) into each projection; fold the
    # q-scale into the fused Q weights/bias.  Constant folding only -- no
    # wrapper-side elementwise pre-scaling of activations.
    w_emb, b_emb = params["w_emb"], params["b_emb"]
    wq_f = (w_emb @ params["wq"]) * scale                      # (1, D)
    bq_f = (b_emb @ params["wq"] + params["bq"]) * scale       # (1, D)
    wk_f = w_emb @ params["wk"]
    bk_f = b_emb @ params["wk"] + params["bk"]
    wv_f = w_emb @ params["wv"]
    bv_f = b_emb @ params["wv"] + params["bv"]

    # Constant block-diagonal additive mask and per-batch mean-pooling matrix.
    batch_ids = jnp.arange(B * L, dtype=jnp.int32) // L
    mask_add = jnp.where(batch_ids[:, None] == batch_ids[None, :],
                         0.0, -1e30).astype(jnp.float32)        # (BL, BL)
    pmat = (jnp.arange(B, dtype=jnp.int32)[:, None] ==
            batch_ids[None, :]).astype(jnp.float32) / L          # (B, BL)

    w2t = params["w2"].T                                         # (1, H)

    kernel = functools.partial(mhattn_kernel, num_heads=num_heads,
                               batch=B, seq_len=L)
    # Single-step call: no grid, every operand lives fully in VMEM
    # (total footprint is a few tens of KB on all TPU generations).
    out, heatmap = pl.pallas_call(
        kernel,
        out_shape=(jax.ShapeDtypeStruct((B, 1), jnp.float32),
                   jax.ShapeDtypeStruct((L, L), jnp.float32)),
    )(x_col,
      wq_f, bq_f, wk_f, bk_f, wv_f, bv_f,
      mask_add, pmat,
      params["wo"], params["bo"],
      params["w1"], params["b1"],
      w2t, params["b2"])
    return out, heatmap


# ----------------- pure-JAX reference (mirrors the PyTorch forward) -----------------
def reference_forward(x, params, *, num_heads):
    B, L = x.shape
    D = params["w_emb"].shape[-1]
    hd = D // num_heads
    xc = x[..., None]
    e = xc * params["w_emb"][None] + params["b_emb"][None]       # (B, L, D)
    q = e @ params["wq"] + params["bq"]
    k = e @ params["wk"] + params["bk"]
    v = e @ params["wv"] + params["bv"]
    qh = q.reshape(B, L, num_heads, hd).transpose(0, 2, 1, 3) / math.sqrt(hd)
    kh = k.reshape(B, L, num_heads, hd).transpose(0, 2, 1, 3)
    vh = v.reshape(B, L, num_heads, hd).transpose(0, 2, 1, 3)
    s = jnp.einsum("bhqd,bhkd->bhqk", qh, kh)
    p = jax.nn.softmax(s, axis=-1)
    o = jnp.einsum("bhqk,bhkd->bhqd", p, vh).transpose(0, 2, 1, 3).reshape(B, L, D)
    attn_out = o @ params["wo"] + params["bo"]
    pooled = attn_out.mean(axis=1)
    h1 = jnp.tanh(pooled @ params["w1"] + params["b1"])
    out = h1 @ params["w2"] + params["b2"]
    heatmap = p.mean(axis=1).mean(axis=0)
    return out, heatmap


def init_params(key, d_model, hidden_dim):
    ks = jax.random.split(key, 14)
    s = 0.1
    f = jnp.float32
    return {
        "w_emb": (s * jax.random.normal(ks[0], (1, d_model))).astype(f),
        "b_emb": (s * jax.random.normal(ks[1], (1, d_model))).astype(f),
        "wq": (s * jax.random.normal(ks[2], (d_model, d_model))).astype(f),
        "bq": (s * jax.random.normal(ks[3], (1, d_model))).astype(f),
        "wk": (s * jax.random.normal(ks[4], (d_model, d_model))).astype(f),
        "bk": (s * jax.random.normal(ks[5], (1, d_model))).astype(f),
        "wv": (s * jax.random.normal(ks[6], (d_model, d_model))).astype(f),
        "bv": (s * jax.random.normal(ks[7], (1, d_model))).astype(f),
        "wo": (s * jax.random.normal(ks[8], (d_model, d_model))).astype(f),
        "bo": (s * jax.random.normal(ks[9], (1, d_model))).astype(f),
        "w1": (s * jax.random.normal(ks[10], (d_model, hidden_dim))).astype(f),
        "b1": (s * jax.random.normal(ks[11], (1, hidden_dim))).astype(f),
        "w2": (s * jax.random.normal(ks[12], (hidden_dim, 1))).astype(f),
        "b2": (s * jax.random.normal(ks[13], (1, 1))).astype(f),
    }


if __name__ == "__main__":
    # small shapes consistent with the module: (batch, seq_len) input
    B, L = 4, 16
    d_model, num_heads, hidden_dim = 32, 4, 32

    key = jax.random.PRNGKey(0)
    kx, kp = jax.random.split(key)
    x = jax.random.normal(kx, (B, L), dtype=jnp.float32)
    params = init_params(kp, d_model, hidden_dim)

    out, heatmap = mhattn_regressor_forward(x, params, num_heads=num_heads)
    out = jax.block_until_ready(out)
    heatmap = jax.block_until_ready(heatmap)

    ref_out, ref_hm = reference_forward(x, params, num_heads=num_heads)
    assert out.shape == (B, 1) and heatmap.shape == (L, L)
    assert jnp.allclose(out, ref_out, rtol=5e-4, atol=1e-5), "output mismatch"
    assert jnp.allclose(heatmap, ref_hm, rtol=5e-4, atol=1e-5), "heatmap mismatch"

    print("KERNEL_OK")
</pallas_src>

<mosaic_0001>
module attributes {stable_mosaic.version = 11 : i64} {
  func.func @mhattn_kernel(%arg0: memref<64x1xf32, #tpu.memory_space<vmem>>, %arg1: memref<1x32xf32, #tpu.memory_space<vmem>>, %arg2: memref<1x32xf32, #tpu.memory_space<vmem>>, %arg3: memref<1x32xf32, #tpu.memory_space<vmem>>, %arg4: memref<1x32xf32, #tpu.memory_space<vmem>>, %arg5: memref<1x32xf32, #tpu.memory_space<vmem>>, %arg6: memref<1x32xf32, #tpu.memory_space<vmem>>, %arg7: memref<64x64xf32, #tpu.memory_space<vmem>>, %arg8: memref<4x64xf32, #tpu.memory_space<vmem>>, %arg9: memref<32x32xf32, #tpu.memory_space<vmem>>, %arg10: memref<1x32xf32, #tpu.memory_space<vmem>>, %arg11: memref<32x32xf32, #tpu.memory_space<vmem>>, %arg12: memref<1x32xf32, #tpu.memory_space<vmem>>, %arg13: memref<1x32xf32, #tpu.memory_space<vmem>>, %arg14: memref<1x1xf32, #tpu.memory_space<vmem>>, %arg15: memref<4x1xf32, #tpu.memory_space<vmem>>, %arg16: memref<16x16xf32, #tpu.memory_space<vmem>>) attributes {dimension_semantics = [], scalar_prefetch = 0 : i64, scratch_operands = 0 : i64, tpu.core_type = #tpu.core_type<tc>} {
    %c0 = arith.constant 0 : index
    %c0_0 = arith.constant 0 : index
    %0 = vector.load %arg0[%c0, %c0_0] : memref<64x1xf32, #tpu.memory_space<vmem>>, vector<64x1xf32>
    %c0_1 = arith.constant 0 : index
    %c0_2 = arith.constant 0 : index
    %1 = vector.load %arg1[%c0_1, %c0_2] : memref<1x32xf32, #tpu.memory_space<vmem>>, vector<1x32xf32>
    %2 = vector.broadcast %0 : vector<64x1xf32> to vector<64x32xf32>
    %3 = vector.broadcast %1 : vector<1x32xf32> to vector<64x32xf32>
    %4 = arith.mulf %2, %3 : vector<64x32xf32>
    %c0_3 = arith.constant 0 : index
    %c0_4 = arith.constant 0 : index
    %5 = vector.load %arg2[%c0_3, %c0_4] : memref<1x32xf32, #tpu.memory_space<vmem>>, vector<1x32xf32>
    %6 = vector.broadcast %5 : vector<1x32xf32> to vector<64x32xf32>
    %7 = arith.addf %4, %6 : vector<64x32xf32>
    %c0_5 = arith.constant 0 : index
    %c0_6 = arith.constant 0 : index
    %8 = vector.load %arg3[%c0_5, %c0_6] : memref<1x32xf32, #tpu.memory_space<vmem>>, vector<1x32xf32>
    %9 = vector.broadcast %0 : vector<64x1xf32> to vector<64x32xf32>
    %10 = vector.broadcast %8 : vector<1x32xf32> to vector<64x32xf32>
    %11 = arith.mulf %9, %10 : vector<64x32xf32>
    %c0_7 = arith.constant 0 : index
    %c0_8 = arith.constant 0 : index
    %12 = vector.load %arg4[%c0_7, %c0_8] : memref<1x32xf32, #tpu.memory_space<vmem>>, vector<1x32xf32>
    %13 = vector.broadcast %12 : vector<1x32xf32> to vector<64x32xf32>
    %14 = arith.addf %11, %13 : vector<64x32xf32>
    %c0_9 = arith.constant 0 : index
    %c0_10 = arith.constant 0 : index
    %15 = vector.load %arg5[%c0_9, %c0_10] : memref<1x32xf32, #tpu.memory_space<vmem>>, vector<1x32xf32>
    %16 = vector.broadcast %0 : vector<64x1xf32> to vector<64x32xf32>
    %17 = vector.broadcast %15 : vector<1x32xf32> to vector<64x32xf32>
    %18 = arith.mulf %16, %17 : vector<64x32xf32>
    %c0_11 = arith.constant 0 : index
    %c0_12 = arith.constant 0 : index
    %19 = vector.load %arg6[%c0_11, %c0_12] : memref<1x32xf32, #tpu.memory_space<vmem>>, vector<1x32xf32>
    %20 = vector.broadcast %19 : vector<1x32xf32> to vector<64x32xf32>
    %21 = arith.addf %18, %20 : vector<64x32xf32>
    %c0_13 = arith.constant 0 : index
    %c0_14 = arith.constant 0 : index
    %22 = vector.load %arg7[%c0_13, %c0_14] : memref<64x64xf32, #tpu.memory_space<vmem>>, vector<64x64xf32>
    %c0_15 = arith.constant 0 : index
    %c0_16 = arith.constant 0 : index
    %23 = vector.load %arg8[%c0_15, %c0_16] : memref<4x64xf32, #tpu.memory_space<vmem>>, vector<4x64xf32>
    %cst = arith.constant 0.000000e+00 : f32
    %24 = vector.broadcast %cst : f32 to vector<64x64xf32>
    %25 = vector.extract_strided_slice %7 {offsets = [0, 0], sizes = [64, 8], strides = [1, 1]} : vector<64x32xf32> to vector<64x8xf32>
    %26 = vector.extract_strided_slice %14 {offsets = [0, 0], sizes = [64, 8], strides = [1, 1]} : vector<64x32xf32> to vector<64x8xf32>
    %27 = vector.extract_strided_slice %21 {offsets = [0, 0], sizes = [64, 8], strides = [1, 1]} : vector<64x32xf32> to vector<64x8xf32>
    %cst_17 = arith.constant dense<0.000000e+00> : vector<64x64xf32>
    %28 = tpu.matmul %25, %26, %cst_17 {dimension_numbers = #tpu.dot_dimension_numbers<[1], [1], [0], [0], [0, 0, 1, 0], [], []>} : vector<64x8xf32>, vector<64x8xf32>, vector<64x64xf32> -> vector<64x64xf32>
    %29 = arith.addf %28, %22 : vector<64x64xf32>
    %cst_18 = arith.constant dense<0xFF800000> : vector<64xf32>
    %30 = vector.multi_reduction <maximumf>, %29, %cst_18 [1] : vector<64x64xf32> to vector<64xf32>
    %31 = vector.shape_cast %30 : vector<64xf32> to vector<64x1xf32>
    %32 = vector.broadcast %31 : vector<64x1xf32> to vector<64x64xf32>
    %33 = arith.subf %29, %32 : vector<64x64xf32>
    %34 = math.exp %33 : vector<64x64xf32>
    %cst_19 = arith.constant dense<0.000000e+00> : vector<64xf32>
    %35 = vector.multi_reduction <add>, %34, %cst_19 [1] : vector<64x64xf32> to vector<64xf32>
    %36 = vector.shape_cast %35 : vector<64xf32> to vector<64x1xf32>
    %37 = vector.broadcast %36 : vector<64x1xf32> to vector<64x64xf32>
    %38 = arith.divf %34, %37 : vector<64x64xf32>
    %39 = arith.addf %24, %38 : vector<64x64xf32>
    %cst_20 = arith.constant dense<0.000000e+00> : vector<4x64xf32>
    %40 = tpu.matmul %23, %38, %cst_20 {dimension_numbers = #tpu.dot_dimension_numbers<[1], [0], [0], [1], [0, 0, 1, 1], [], []>} : vector<4x64xf32>, vector<64x64xf32>, vector<4x64xf32> -> vector<4x64xf32>
    %cst_21 = arith.constant dense<0.000000e+00> : vector<4x8xf32>
    %41 = tpu.matmul %40, %27, %cst_21 {dimension_numbers = #tpu.dot_dimension_numbers<[1], [0], [0], [1], [0, 0, 1, 1], [], []>} : vector<4x64xf32>, vector<64x8xf32>, vector<4x8xf32> -> vector<4x8xf32>
    %42 = vector.extract_strided_slice %7 {offsets = [0, 8], sizes = [64, 8], strides = [1, 1]} : vector<64x32xf32> to vector<64x8xf32>
    %43 = vector.extract_strided_slice %14 {offsets = [0, 8], sizes = [64, 8], strides = [1, 1]} : vector<64x32xf32> to vector<64x8xf32>
    %44 = vector.extract_strided_slice %21 {offsets = [0, 8], sizes = [64, 8], strides = [1, 1]} : vector<64x32xf32> to vector<64x8xf32>
    %cst_22 = arith.constant dense<0.000000e+00> : vector<64x64xf32>
    %45 = tpu.matmul %42, %43, %cst_22 {dimension_numbers = #tpu.dot_dimension_numbers<[1], [1], [0], [0], [0, 0, 1, 0], [], []>} : vector<64x8xf32>, vector<64x8xf32>, vector<64x64xf32> -> vector<64x64xf32>
    %46 = arith.addf %45, %22 : vector<64x64xf32>
    %cst_23 = arith.constant dense<0xFF800000> : vector<64xf32>
    %47 = vector.multi_reduction <maximumf>, %46, %cst_23 [1] : vector<64x64xf32> to vector<64xf32>
    %48 = vector.shape_cast %47 : vector<64xf32> to vector<64x1xf32>
    %49 = vector.broadcast %48 : vector<64x1xf32> to vector<64x64xf32>
    %50 = arith.subf %46, %49 : vector<64x64xf32>
    %51 = math.exp %50 : vector<64x64xf32>
    %cst_24 = arith.constant dense<0.000000e+00> : vector<64xf32>
    %52 = vector.multi_reduction <add>, %51, %cst_24 [1] : vector<64x64xf32> to vector<64xf32>
    %53 = vector.shape_cast %52 : vector<64xf32> to vector<64x1xf32>
    %54 = vector.broadcast %53 : vector<64x1xf32> to vector<64x64xf32>
    %55 = arith.divf %51, %54 : vector<64x64xf32>
    %56 = arith.addf %39, %55 : vector<64x64xf32>
    %cst_25 = arith.constant dense<0.000000e+00> : vector<4x64xf32>
    %57 = tpu.matmul %23, %55, %cst_25 {dimension_numbers = #tpu.dot_dimension_numbers<[1], [0], [0], [1], [0, 0, 1, 1], [], []>} : vector<4x64xf32>, vector<64x64xf32>, vector<4x64xf32> -> vector<4x64xf32>
    %cst_26 = arith.constant dense<0.000000e+00> : vector<4x8xf32>
    %58 = tpu.matmul %57, %44, %cst_26 {dimension_numbers = #tpu.dot_dimension_numbers<[1], [0], [0], [1], [0, 0, 1, 1], [], []>} : vector<4x64xf32>, vector<64x8xf32>, vector<4x8xf32> -> vector<4x8xf32>
    %59 = vector.extract_strided_slice %7 {offsets = [0, 16], sizes = [64, 8], strides = [1, 1]} : vector<64x32xf32> to vector<64x8xf32>
    %60 = vector.extract_strided_slice %14 {offsets = [0, 16], sizes = [64, 8], strides = [1, 1]} : vector<64x32xf32> to vector<64x8xf32>
    %61 = vector.extract_strided_slice %21 {offsets = [0, 16], sizes = [64, 8], strides = [1, 1]} : vector<64x32xf32> to vector<64x8xf32>
    %cst_27 = arith.constant dense<0.000000e+00> : vector<64x64xf32>
    %62 = tpu.matmul %59, %60, %cst_27 {dimension_numbers = #tpu.dot_dimension_numbers<[1], [1], [0], [0], [0, 0, 1, 0], [], []>} : vector<64x8xf32>, vector<64x8xf32>, vector<64x64xf32> -> vector<64x64xf32>
    %63 = arith.addf %62, %22 : vector<64x64xf32>
    %cst_28 = arith.constant dense<0xFF800000> : vector<64xf32>
    %64 = vector.multi_reduction <maximumf>, %63, %cst_28 [1] : vector<64x64xf32> to vector<64xf32>
    %65 = vector.shape_cast %64 : vector<64xf32> to vector<64x1xf32>
    %66 = vector.broadcast %65 : vector<64x1xf32> to vector<64x64xf32>
    %67 = arith.subf %63, %66 : vector<64x64xf32>
    %68 = math.exp %67 : vector<64x64xf32>
    %cst_29 = arith.constant dense<0.000000e+00> : vector<64xf32>
    %69 = vector.multi_reduction <add>, %68, %cst_29 [1] : vector<64x64xf32> to vector<64xf32>
    %70 = vector.shape_cast %69 : vector<64xf32> to vector<64x1xf32>
    %71 = vector.broadcast %70 : vector<64x1xf32> to vector<64x64xf32>
    %72 = arith.divf %68, %71 : vector<64x64xf32>
    %73 = arith.addf %56, %72 : vector<64x64xf32>
    %cst_30 = arith.constant dense<0.000000e+00> : vector<4x64xf32>
    %74 = tpu.matmul %23, %72, %cst_30 {dimension_numbers = #tpu.dot_dimension_numbers<[1], [0], [0], [1], [0, 0, 1, 1], [], []>} : vector<4x64xf32>, vector<64x64xf32>, vector<4x64xf32> -> vector<4x64xf32>
    %cst_31 = arith.constant dense<0.000000e+00> : vector<4x8xf32>
    %75 = tpu.matmul %74, %61, %cst_31 {dimension_numbers = #tpu.dot_dimension_numbers<[1], [0], [0], [1], [0, 0, 1, 1], [], []>} : vector<4x64xf32>, vector<64x8xf32>, vector<4x8xf32> -> vector<4x8xf32>
    %76 = vector.extract_strided_slice %7 {offsets = [0, 24], sizes = [64, 8], strides = [1, 1]} : vector<64x32xf32> to vector<64x8xf32>
    %77 = vector.extract_strided_slice %14 {offsets = [0, 24], sizes = [64, 8], strides = [1, 1]} : vector<64x32xf32> to vector<64x8xf32>
    %78 = vector.extract_strided_slice %21 {offsets = [0, 24], sizes = [64, 8], strides = [1, 1]} : vector<64x32xf32> to vector<64x8xf32>
    %cst_32 = arith.constant dense<0.000000e+00> : vector<64x64xf32>
    %79 = tpu.matmul %76, %77, %cst_32 {dimension_numbers = #tpu.dot_dimension_numbers<[1], [1], [0], [0], [0, 0, 1, 0], [], []>} : vector<64x8xf32>, vector<64x8xf32>, vector<64x64xf32> -> vector<64x64xf32>
    %80 = arith.addf %79, %22 : vector<64x64xf32>
    %cst_33 = arith.constant dense<0xFF800000> : vector<64xf32>
    %81 = vector.multi_reduction <maximumf>, %80, %cst_33 [1] : vector<64x64xf32> to vector<64xf32>
    %82 = vector.shape_cast %81 : vector<64xf32> to vector<64x1xf32>
    %83 = vector.broadcast %82 : vector<64x1xf32> to vector<64x64xf32>
    %84 = arith.subf %80, %83 : vector<64x64xf32>
    %85 = math.exp %84 : vector<64x64xf32>
    %cst_34 = arith.constant dense<0.000000e+00> : vector<64xf32>
    %86 = vector.multi_reduction <add>, %85, %cst_34 [1] : vector<64x64xf32> to vector<64xf32>
    %87 = vector.shape_cast %86 : vector<64xf32> to vector<64x1xf32>
    %88 = vector.broadcast %87 : vector<64x1xf32> to vector<64x64xf32>
    %89 = arith.divf %85, %88 : vector<64x64xf32>
    %90 = arith.addf %73, %89 : vector<64x64xf32>
    %cst_35 = arith.constant dense<0.000000e+00> : vector<4x64xf32>
    %91 = tpu.matmul %23, %89, %cst_35 {dimension_numbers = #tpu.dot_dimension_numbers<[1], [0], [0], [1], [0, 0, 1, 1], [], []>} : vector<4x64xf32>, vector<64x64xf32>, vector<4x64xf32> -> vector<4x64xf32>
    %cst_36 = arith.constant dense<0.000000e+00> : vector<4x8xf32>
    %92 = tpu.matmul %91, %78, %cst_36 {dimension_numbers = #tpu.dot_dimension_numbers<[1], [0], [0], [1], [0, 0, 1, 1], [], []>} : vector<4x64xf32>, vector<64x8xf32>, vector<4x8xf32> -> vector<4x8xf32>
    %93 = tpu.concatenate %41, %58, %75, %92 in 1 : vector<4x8xf32>, vector<4x8xf32>, vector<4x8xf32>, vector<4x8xf32> -> vector<4x32xf32>
    %c0_37 = arith.constant 0 : index
    %c0_38 = arith.constant 0 : index
    %94 = vector.load %arg9[%c0_37, %c0_38] : memref<32x32xf32, #tpu.memory_space<vmem>>, vector<32x32xf32>
    %cst_39 = arith.constant dense<0.000000e+00> : vector<4x32xf32>
    %95 = tpu.matmul %93, %94, %cst_39 {dimension_numbers = #tpu.dot_dimension_numbers<[1], [0], [0], [1], [0, 0, 1, 1], [], []>} : vector<4x32xf32>, vector<32x32xf32>, vector<4x32xf32> -> vector<4x32xf32>
    %c0_40 = arith.constant 0 : index
    %c0_41 = arith.constant 0 : index
    %96 = vector.load %arg10[%c0_40, %c0_41] : memref<1x32xf32, #tpu.memory_space<vmem>>, vector<1x32xf32>
    %97 = vector.broadcast %96 : vector<1x32xf32> to vector<4x32xf32>
    %98 = arith.addf %95, %97 : vector<4x32xf32>
    %c0_42 = arith.constant 0 : index
    %c0_43 = arith.constant 0 : index
    %99 = vector.load %arg11[%c0_42, %c0_43] : memref<32x32xf32, #tpu.memory_space<vmem>>, vector<32x32xf32>
    %cst_44 = arith.constant dense<0.000000e+00> : vector<4x32xf32>
    %100 = tpu.matmul %98, %99, %cst_44 {dimension_numbers = #tpu.dot_dimension_numbers<[1], [0], [0], [1], [0, 0, 1, 1], [], []>} : vector<4x32xf32>, vector<32x32xf32>, vector<4x32xf32> -> vector<4x32xf32>
    %c0_45 = arith.constant 0 : index
    %c0_46 = arith.constant 0 : index
    %101 = vector.load %arg12[%c0_45, %c0_46] : memref<1x32xf32, #tpu.memory_space<vmem>>, vector<1x32xf32>
    %102 = vector.broadcast %101 : vector<1x32xf32> to vector<4x32xf32>
    %103 = arith.addf %100, %102 : vector<4x32xf32>
    %104 = math.tanh %103 : vector<4x32xf32>
    %c0_47 = arith.constant 0 : index
    %c0_48 = arith.constant 0 : index
    %105 = vector.load %arg13[%c0_47, %c0_48] : memref<1x32xf32, #tpu.memory_space<vmem>>, vector<1x32xf32>
    %106 = vector.broadcast %105 : vector<1x32xf32> to vector<4x32xf32>
    %107 = arith.mulf %104, %106 : vector<4x32xf32>
    %cst_49 = arith.constant dense<0.000000e+00> : vector<4xf32>
    %108 = vector.multi_reduction <add>, %107, %cst_49 [1] : vector<4x32xf32> to vector<4xf32>
    %109 = vector.shape_cast %108 : vector<4xf32> to vector<4x1xf32>
    %c0_50 = arith.constant 0 : index
    %c0_51 = arith.constant 0 : index
    %110 = vector.load %arg14[%c0_50, %c0_51] : memref<1x1xf32, #tpu.memory_space<vmem>>, vector<1x1xf32>
    %111 = vector.broadcast %110 : vector<1x1xf32> to vector<4x1xf32>
    %112 = arith.addf %109, %111 : vector<4x1xf32>
    %c0_52 = arith.constant 0 : index
    %c0_53 = arith.constant 0 : index
    %113 = vector.load %arg15[%c0_52, %c0_53] : memref<4x1xf32, #tpu.memory_space<vmem>>, vector<4x1xf32>
    tpu.vector_store %arg15[%c0_52, %c0_53], %112 {strides = array<i32>} : memref<4x1xf32, #tpu.memory_space<vmem>>, vector<4x1xf32>,
    %114 = vector.extract_strided_slice %90 {offsets = [0, 0], sizes = [16, 16], strides = [1, 1]} : vector<64x64xf32> to vector<16x16xf32>
    %115 = vector.extract_strided_slice %90 {offsets = [16, 16], sizes = [16, 16], strides = [1, 1]} : vector<64x64xf32> to vector<16x16xf32>
    %116 = arith.addf %114, %115 : vector<16x16xf32>
    %117 = vector.extract_strided_slice %90 {offsets = [32, 32], sizes = [16, 16], strides = [1, 1]} : vector<64x64xf32> to vector<16x16xf32>
    %118 = arith.addf %116, %117 : vector<16x16xf32>
    %119 = vector.extract_strided_slice %90 {offsets = [48, 48], sizes = [16, 16], strides = [1, 1]} : vector<64x64xf32> to vector<16x16xf32>
    %120 = arith.addf %118, %119 : vector<16x16xf32>
    %cst_54 = arith.constant 6.250000e-02 : f32
    %121 = vector.broadcast %cst_54 : f32 to vector<16x16xf32>
    %122 = arith.mulf %120, %121 : vector<16x16xf32>
    %c0_55 = arith.constant 0 : index
    %c0_56 = arith.constant 0 : index
    %123 = vector.load %arg16[%c0_55, %c0_56] : memref<16x16xf32, #tpu.memory_space<vmem>>, vector<16x16xf32>
    tpu.vector_store %arg16[%c0_55, %c0_56], %122 {strides = array<i32>} : memref<16x16xf32, #tpu.memory_space<vmem>>, vector<16x16xf32>,
    return
  }
}

</mosaic_0001>

<llo_original>
// kernel: tpu_custom_call.1
$region0: #{tpu_custom_call.1}
  #allocation0 [shape = 'u32[]', space=smem, size = 0x4, offset = 0x4, fixed_abs, tag = 'smem constant byte address 0x4 - core index']
  #allocation1 [shape = 'u32[144,128]{1,0:T(1,128)}', space=vmem, size = 0x12000, scoped, tag = 'internal scratch']
  #allocation2 [shape = 'f32[1,1]{1,0:T(1,128)S(1)}', space=vmem, size = 0x200, scoped, tag = 'scoped memory for tpu_custom_call.1']
  %s0 = inlined_call_operand.vmem [shape: f32[64,1], index: 0, kind: input, shape index: {}]
  %s1 = inlined_call_operand.vmem [shape: f32[1,32], index: 1, kind: input, shape index: {}]
  %s2 = inlined_call_operand.vmem [shape: f32[1,32], index: 2, kind: input, shape index: {}]
  %s3 = inlined_call_operand.vmem [shape: f32[1,32], index: 3, kind: input, shape index: {}]
  %s4 = inlined_call_operand.hbm [shape: f32[1,32], index: 4, kind: input, shape index: {}]
  %s5 = inlined_call_operand.hbm [shape: f32[1,32], index: 5, kind: input, shape index: {}]
  %s6 = inlined_call_operand.hbm [shape: f32[1,32], index: 6, kind: input, shape index: {}]
  %s7 = inlined_call_operand.vmem [shape: f32[64,64], index: 7, kind: input, shape index: {}]
  %s8 = inlined_call_operand.hbm [shape: f32[4,64], index: 8, kind: input, shape index: {}]
  %s9 = inlined_call_operand.vmem [shape: f32[32,32], index: 9, kind: input, shape index: {}]
  %s10 = inlined_call_operand.vmem [shape: f32[1,32], index: 10, kind: input, shape index: {}]
  %s11 = inlined_call_operand.hbm [shape: f32[32,32], index: 11, kind: input, shape index: {}]
  %s12 = inlined_call_operand.vmem [shape: f32[1,32], index: 12, kind: input, shape index: {}]
  %s13 = inlined_call_operand.vmem [shape: f32[1,32], index: 13, kind: input, shape index: {}]
  %s14 = inlined_call_operand.<no memory space> [shape: f32[1,1], index: 14, kind: input, shape index: {}]
  %s15 = inlined_call_operand.vmem [shape: f32[4,1], index: 15, kind: output, shape index: {0}]
  %s16 = inlined_call_operand.hbm [shape: f32[16,16], index: 16, kind: output, shape index: {1}]
  %17 = xla_tuple %s15, %s16
  %s18 = sld [smem:[#allocation0]]
  $region98: #{tpu_custom_call.1} parent=0
    _
  %s20 = ssub.s32 1, %s18
  %s21 = scalar_select 0, %s20, %s18
  %v22 = vstv %s14
  %23 = vst [vmem:[#allocation2] sm:$0x1] %v22
  $region1: #{tpu_custom_call.1} parent=0
    #allocation3 [shape = 'u8[512]{0}', space=vmem, size = 0x400, scoped, tag = 'input window, operand 4, single buffered']
    #allocation4 [shape = 's32[1]{0}', space=sflag, size = 0x4, scoped, tag = 'scoped memory for tpu_custom_call.1']
    #allocation5 [shape = 's32[1]{0}', space=sflag, size = 0x4, scoped, tag = 'scoped memory for tpu_custom_call.1']
    #allocation6 [shape = 'u8[512]{0}', space=vmem, size = 0x400, scoped, tag = 'input window, operand 5, single buffered']
    #allocation7 [shape = 's32[1]{0}', space=sflag, size = 0x4, scoped, tag = 'scoped memory for tpu_custom_call.1']
    #allocation8 [shape = 'u8[512]{0}', space=vmem, size = 0x400, scoped, tag = 'input window, operand 6, single buffered']
    #allocation9 [shape = 'u8[2048]{0}', space=vmem, size = 0x800, scoped, tag = 'input window, operand 8, single buffered']
    #allocation10 [shape = 's32[1]{0}', space=sflag, size = 0x4, scoped, tag = 'scoped memory for tpu_custom_call.1']
    #allocation11 [shape = 'u8[16384]{0}', space=vmem, size = 0x4000, scoped, tag = 'input window, operand 11, single buffered']
    #allocation12 [shape = 'u8[8192]{0}', space=vmem, size = 0x2000, scoped, tag = 'output window, operand 1, single buffered']
    %24 = vsyncpa [#allocation4], 0
    %25 = vsyncpa [#allocation7], 0
    %26 = vsyncpa [#allocation10], 0
    %27 = vsyncpa [#allocation5], 0
    // Predicated region
    $region2: #{tpu_custom_call.1} parent=1 // pred_check
      _
    $region3: #{tpu_custom_call.1} parent=1 // pred_check_branch
      %29 = sbr.rel (0) target = $region5
    $region4: #{tpu_custom_call.1} parent=1 // pred_region
      _
    $region5: #{tpu_custom_call.1} parent=1 // pred_fallthru
      _
    // Predicated region
    $region6: #{tpu_custom_call.1} parent=1 // pred_check
      _
    $region7: #{tpu_custom_call.1} parent=1 // pred_check_branch
      %31 = sbr.rel (0) target = $region9
    $region8: #{tpu_custom_call.1} parent=1 // pred_region
      _
    $region9: #{tpu_custom_call.1} parent=1 // pred_fallthru
      _
    // Predicated region
    $region10: #{tpu_custom_call.1} parent=1 // pred_check
      _
    $region11: #{tpu_custom_call.1} parent=1 // pred_check_branch
      %33 = sbr.rel (0) target = $region13
    $region12: #{tpu_custom_call.1} parent=1 // pred_region
      _
    $region13: #{tpu_custom_call.1} parent=1 // pred_fallthru
      _
    // Predicated region
    $region14: #{tpu_custom_call.1} parent=1 // pred_check
      _
    $region15: #{tpu_custom_call.1} parent=1 // pred_check_branch
      %35 = sbr.rel (0) target = $region17
    $region16: #{tpu_custom_call.1} parent=1 // pred_region
      _
    $region17: #{tpu_custom_call.1} parent=1 // pred_fallthru
      _
    // Predicated region
    $region18: #{tpu_custom_call.1} parent=1 // pred_check
      _
    $region19: #{tpu_custom_call.1} parent=1 // pred_check_branch
      %37 = sbr.rel (0) target = $region21
    $region20: #{tpu_custom_call.1} parent=1 // pred_region
      %s39 = ssub.s32 16, 16
      %40 = vsyncadd [#allocation4], %s39
      %s42 = sshll.u32 [#allocation3], 4
      %s43 = int_to_ptr.vmem [resolvable:$true] %s42
      %45 = dma.hbm_to_vmem [thread:$0]  %s4, 16, %s43, [#allocation4]
    $region21: #{tpu_custom_call.1} parent=1 // pred_fallthru
      _
    // Predicated region
    $region22: #{tpu_custom_call.1} parent=1 // pred_check
      _
    $region23: #{tpu_custom_call.1} parent=1 // pred_check_branch
      %47 = sbr.rel (0) target = $region25
    $region24: #{tpu_custom_call.1} parent=1 // pred_region
      %s49 = ssub.s32 16, 16
      %50 = vsyncadd [#allocation7], %s49
      %s52 = sshll.u32 [#allocation6], 4
      %s53 = int_to_ptr.vmem [resolvable:$true] %s52
      %55 = dma.hbm_to_vmem [thread:$0]  %s5, 16, %s53, [#allocation7]
    $region25: #{tpu_custom_call.1} parent=1 // pred_fallthru
      _
    // Predicated region
    $region26: #{tpu_custom_call.1} parent=1 // pred_check
      _
    $region27: #{tpu_custom_call.1} parent=1 // pred_check_branch
      %57 = sbr.rel (0) target = $region29
    $region28: #{tpu_custom_call.1} parent=1 // pred_region
      %s59 = ssub.s32 16, 16
      %60 = vsyncadd [#allocation7], %s59
      %s62 = sshll.u32 [#allocation8], 4
      %s63 = int_to_ptr.vmem [resolvable:$true] %s62
      %65 = dma.hbm_to_vmem [thread:$0]  %s6, 16, %s63, [#allocation7]
    $region29: #{tpu_custom_call.1} parent=1 // pred_fallthru
      _
    // Predicated region
    $region30: #{tpu_custom_call.1} parent=1 // pred_check
      _
    $region31: #{tpu_custom_call.1} parent=1 // pred_check_branch
      %67 = sbr.rel (0) target = $region33
    $region32: #{tpu_custom_call.1} parent=1 // pred_region
      _
    $region33: #{tpu_custom_call.1} parent=1 // pred_fallthru
      _
    // Predicated region
    $region34: #{tpu_custom_call.1} parent=1 // pred_check
      _
    $region35: #{tpu_custom_call.1} parent=1 // pred_check_branch
      %69 = sbr.rel (0) target = $region37
    $region36: #{tpu_custom_call.1} parent=1 // pred_region
      %s71 = ssub.s32 64, 64
      %72 = vsyncadd [#allocation10], %s71
      %s74 = sshll.u32 [#allocation9], 4
      %s75 = int_to_ptr.vmem [resolvable:$true] %s74
      %77 = dma.hbm_to_vmem [thread:$0]  %s8, 64, %s75, [#allocation10]
    $region37: #{tpu_custom_call.1} parent=1 // pred_fallthru
      _
    // Predicated region
    $region38: #{tpu_custom_call.1} parent=1 // pred_check
      _
    $region39: #{tpu_custom_call.1} parent=1 // pred_check_branch
      %79 = sbr.rel (0) target = $region41
    $region40: #{tpu_custom_call.1} parent=1 // pred_region
      _
    $region41: #{tpu_custom_call.1} parent=1 // pred_fallthru
      _
    // Predicated region
    $region42: #{tpu_custom_call.1} parent=1 // pred_check
      _
    $region43: #{tpu_custom_call.1} parent=1 // pred_check_branch
      %81 = sbr.rel (0) target = $region45
    $region44: #{tpu_custom_call.1} parent=1 // pred_region
      _
    $region45: #{tpu_custom_call.1} parent=1 // pred_fallthru
      _
    // Predicated region
    $region46: #{tpu_custom_call.1} parent=1 // pred_check
      _
    $region47: #{tpu_custom_call.1} parent=1 // pred_check_branch
      %83 = sbr.rel (0) target = $region49
    $region48: #{tpu_custom_call.1} parent=1 // pred_region
      %s85 = ssub.s32 512, 512
      %86 = vsyncadd [#allocation10], %s85
      %s87 = sshll.u32 [#allocation11], 4
      %s88 = int_to_ptr.vmem [resolvable:$true] %s87
      %93 = dma.hbm_to_vmem [thread:$0]  %s11, 512, %s88, [#allocation10], 128, 128, 8
    $region49: #{tpu_custom_call.1} parent=1 // pred_fallthru
      _
    // Predicated region
    $region50: #{tpu_custom_call.1} parent=1 // pred_check
      _
    $region51: #{tpu_custom_call.1} parent=1 // pred_check_branch
      %95 = sbr.rel (0) target = $region53
    $region52: #{tpu_custom_call.1} parent=1 // pred_region
      _
    $region53: #{tpu_custom_call.1} parent=1 // pred_fallthru
      _
    // Predicated region
    $region54: #{tpu_custom_call.1} parent=1 // pred_check
      _
    $region55: #{tpu_custom_call.1} parent=1 // pred_check_branch
      %97 = sbr.rel (0) target = $region57
    $region56: #{tpu_custom_call.1} parent=1 // pred_region
      _
    $region57: #{tpu_custom_call.1} parent=1 // pred_fallthru
      _
    // Predicated region
    $region58: #{tpu_custom_call.1} parent=1 // pred_check
      _
    $region59: #{tpu_custom_call.1} parent=1 // pred_check_branch
      %99 = sbr.rel (0) target = $region61
    $region60: #{tpu_custom_call.1} parent=1 // pred_region
      _
    $region61: #{tpu_custom_call.1} parent=1 // pred_fallthru
      _
    // Predicated region
    $region62: #{tpu_custom_call.1} parent=1 // pred_check
      _
    $region63: #{tpu_custom_call.1} parent=1 // pred_check_branch
      %101 = sbr.rel (0) target = $region65
    $region64: #{tpu_custom_call.1} parent=1 // pred_region
      %102 = dma.done [#allocation4], 16
    $region65: #{tpu_custom_call.1} parent=1 // pred_fallthru
      _
    // Predicated region
    $region66: #{tpu_custom_call.1} parent=1 // pred_check
      _
    $region67: #{tpu_custom_call.1} parent=1 // pred_check_branch
      %104 = sbr.rel (0) target = $region69
    $region68: #{tpu_custom_call.1} parent=1 // pred_region
      %105 = dma.done [#allocation7], 16
    $region69: #{tpu_custom_call.1} parent=1 // pred_fallthru
      _
    // Predicated region
    $region70: #{tpu_custom_call.1} parent=1 // pred_check
      _
    $region71: #{tpu_custom_call.1} parent=1 // pred_check_branch
      %107 = sbr.rel (0) target = $region73
    $region72: #{tpu_custom_call.1} parent=1 // pred_region
      %108 = dma.done [#allocation7], 16
    $region73: #{tpu_custom_call.1} parent=1 // pred_fallthru
      _
    // Predicated region
    $region74: #{tpu_custom_call.1} parent=1 // pred_check
      _
    $region75: #{tpu_custom_call.1} parent=1 // pred_check_branch
      %110 = sbr.rel (0) target = $region77
    $region76: #{tpu_custom_call.1} parent=1 // pred_region
      %111 = dma.done [#allocation10], 64
    $region77: #{tpu_custom_call.1} parent=1 // pred_fallthru
      _
    // Predicated region
    $region78: #{tpu_custom_call.1} parent=1 // pred_check
      _
    $region79: #{tpu_custom_call.1} parent=1 // pred_check_branch
      %113 = sbr.rel (0) target = $region81
    $region80: #{tpu_custom_call.1} parent=1 // pred_region
      %114 = dma.done [#allocation10], 512
    $region81: #{tpu_custom_call.1} parent=1 // pred_fallthru
      _
    %v115 = vld [vmem:[%s0] sm:$0xff]
    %v116 = vld [vmem:[%s0 + $0x8] sm:$0xff]
    %v117 = vld [vmem:[%s0 + $0x10] sm:$0xff]
    %v118 = vld [vmem:[%s0 + $0x18] sm:$0xff]
    %v119 = vld [vmem:[%s0 + $0x20] sm:$0xff]
    %v120 = vld [vmem:[%s0 + $0x28] sm:$0xff]
    %v121 = vld [vmem:[%s0 + $0x30] sm:$0xff]
    %v122 = vld [vmem:[%s0 + $0x38] sm:$0xff]
    %v123 = vld [vmem:[%s1] sm:$0x1]
    %125 = vset.pattern.permute.xlu0 0
    %126 = vperm.xlu0 %125, %v115
    %v127 = vpop.permute.xlu0 %126
    %130 = vset.pattern.permute.xlu0 0
    %131 = vperm.xlu0 %130, %v116
    %v132 = vpop.permute.xlu0 %131
    %135 = vset.pattern.permute.xlu0 0
    %136 = vperm.xlu0 %135, %v117
    %v137 = vpop.permute.xlu0 %136
    %140 = vset.pattern.permute.xlu0 0
    %141 = vperm.xlu0 %140, %v118
    %v142 = vpop.permute.xlu0 %141
    %145 = vset.pattern.permute.xlu0 0
    %146 = vperm.xlu0 %145, %v119
    %v147 = vpop.permute.xlu0 %146
    %150 = vset.pattern.permute.xlu0 0
    %151 = vperm.xlu0 %150, %v120
    %v152 = vpop.permute.xlu0 %151
    %155 = vset.pattern.permute.xlu0 0
    %156 = vperm.xlu0 %155, %v121
    %v157 = vpop.permute.xlu0 %156
    %160 = vset.pattern.permute.xlu0 0
    %161 = vperm.xlu0 %160, %v122
    %v162 = vpop.permute.xlu0 %161
    %v165 = vlaneseq
    %v166 = vshrl.u32 %v165, 7
    %v167 = vsub.s32 0, %v166
    %v168 = vrot.slane %v123, %v167
    %v170 = vmul.f32 %v127, %v168
    %v171 = vmul.f32 %v132, %v168
    %v172 = vmul.f32 %v137, %v168
    %v173 = vmul.f32 %v142, %v168
    %v174 = vmul.f32 %v147, %v168
    %v175 = vmul.f32 %v152, %v168
    %v176 = vmul.f32 %v157, %v168
    %v177 = vmul.f32 %v162, %v168
    %v178 = vld [vmem:[%s2] sm:$0x1]
    %v180 = vlaneseq
    %v181 = vshrl.u32 %v180, 7
    %v182 = vsub.s32 0, %v181
    %v183 = vrot.slane %v178, %v182
    %v185 = vadd.f32 %v170, %v183
    %v186 = vadd.f32 %v171, %v183
    %v187 = vadd.f32 %v172, %v183
    %v188 = vadd.f32 %v173, %v183
    %v189 = vadd.f32 %v174, %v183
    %v190 = vadd.f32 %v175, %v183
    %v191 = vadd.f32 %v176, %v183
    %v192 = vadd.f32 %v177, %v183
    %v193 = vld [vmem:[%s3] sm:$0x1]
    %v195 = vlaneseq
    %v196 = vshrl.u32 %v195, 7
    %v197 = vsub.s32 0, %v196
    %v198 = vrot.slane %v193, %v197
    %v200 = vmul.f32 %v127, %v198
    %v201 = vmul.f32 %v132, %v198
    %v202 = vmul.f32 %v137, %v198
    %v203 = vmul.f32 %v142, %v198
    %v204 = vmul.f32 %v147, %v198
    %v205 = vmul.f32 %v152, %v198
    %v206 = vmul.f32 %v157, %v198
    %v207 = vmul.f32 %v162, %v198
    %v208 = vld [vmem:[#allocation3] sm:$0x1]
    %v210 = vlaneseq
    %v211 = vshrl.u32 %v210, 7
    %v212 = vsub.s32 0, %v211
    %v213 = vrot.slane %v208, %v212
    %v215 = vadd.f32 %v200, %v213
    %v216 = vadd.f32 %v201, %v213
    %v217 = vadd.f32 %v202, %v213
    %v218 = vadd.f32 %v203, %v213
    %v219 = vadd.f32 %v204, %v213
    %v220 = vadd.f32 %v205, %v213
    %v221 = vadd.f32 %v206, %v213
    %v222 = vadd.f32 %v207, %v213
    %v223 = vld [vmem:[#allocation6] sm:$0x1]
    %v225 = vlaneseq
    %v226 = vshrl.u32 %v225, 7
    %v227 = vsub.s32 0, %v226
    %v228 = vrot.slane %v223, %v227
    %v230 = vmul.f32 %v127, %v228
    %v231 = vmul.f32 %v132, %v228
    %v232 = vmul.f32 %v137, %v228
    %v233 = vmul.f32 %v142, %v228
    %v234 = vmul.f32 %v147, %v228
    %v235 = vmul.f32 %v152, %v228
    %v236 = vmul.f32 %v157, %v228
    %v237 = vmul.f32 %v162, %v228
    %v238 = vld [vmem:[#allocation8] sm:$0x1]
    %v240 = vlaneseq
    %v241 = vshrl.u32 %v240, 7
    %v242 = vsub.s32 0, %v241
    %v243 = vrot.slane %v238, %v242
    %v245 = vadd.f32 %v230, %v243
    %v246 = vadd.f32 %v231, %v243
    %v247 = vadd.f32 %v232, %v243
    %v248 = vadd.f32 %v233, %v243
    %v249 = vadd.f32 %v234, %v243
    %v250 = vadd.f32 %v235, %v243
    %v251 = vadd.f32 %v236, %v243
    %v252 = vadd.f32 %v237, %v243
    %v253 = vld [vmem:[%s7] sm:$0xff]
    %v254 = vld [vmem:[%s7 + $0x8] sm:$0xff]
    %v255 = vld [vmem:[%s7 + $0x10] sm:$0xff]
    %v256 = vld [vmem:[%s7 + $0x18] sm:$0xff]
    %v257 = vld [vmem:[%s7 + $0x20] sm:$0xff]
    %v258 = vld [vmem:[%s7 + $0x28] sm:$0xff]
    %v259 = vld [vmem:[%s7 + $0x30] sm:$0xff]
    %v260 = vld [vmem:[%s7 + $0x38] sm:$0xff]
    %v261 = vld [vmem:[#allocation9] sm:$0xf]
    %vm262 = vcmask 64512
    %v264 = vsel %vm262, %v185, 0
    %v267 = vsel %vm262, %v186, 0
    %v270 = vsel %vm262, %v187, 0
    %v273 = vsel %vm262, %v188, 0
    %v276 = vsel %vm262, %v189, 0
    %v279 = vsel %vm262, %v190, 0
    %v282 = vsel %vm262, %v191, 0
    %v285 = vsel %vm262, %v192, 0
    %v288 = vsel %vm262, %v215, 0
    %v291 = vsel %vm262, %v216, 0
    %v294 = vsel %vm262, %v217, 0
    %v297 = vsel %vm262, %v218, 0
    %v300 = vsel %vm262, %v219, 0
    %v303 = vsel %vm262, %v220, 0
    %v306 = vsel %vm262, %v221, 0
    %v309 = vsel %vm262, %v222, 0
    %311 = vmatprep.subr.mxu0 0.0
    %312 = vmatpush1.xpose.msra.mxu0 %v288
    %313 = vmatprep.subr.mxu0 0.0
    %314 = vmatpush1.xpose.msra.mxu0 %v291
    %315 = vmatprep.subr.mxu0 0.0
    %316 = vmatpush1.xpose.msra.mxu0 %v294
    %317 = vmatprep.subr.mxu0 0.0
    %318 = vmatpush1.xpose.msra.mxu0 %v297
    %319 = vmatprep.subr.mxu0 0.0
    %320 = vmatpush1.xpose.msra.mxu0 %v300
    %321 = vmatprep.subr.mxu0 0.0
    %322 = vmatpush1.xpose.msra.mxu0 %v303
    %323 = vmatprep.subr.mxu0 0.0
    %324 = vmatpush1.xpose.msra.mxu0 %v306
    %325 = vmatprep.subr.mxu0 0.0
    %326 = vmatpush1.xpose.msra.mxu0 %v309
    %327 = vmatprep.subr.mxu0 0.0
    %328 = vmatpush1.xpose.msra.mxu0 0.0
    %329 = vmatprep.subr.mxu0 0.0
    %330 = vmatpush1.xpose.msra.mxu0 0.0
    %331 = vmatprep.subr.mxu0 0.0
    %332 = vmatpush1.xpose.msra.mxu0 0.0
    %333 = vmatprep.subr.mxu0 0.0
    %334 = vmatpush1.xpose.msra.mxu0 0.0
    %335 = vmatprep.subr.mxu0 0.0
    %336 = vmatpush1.xpose.msra.mxu0 0.0
    %337 = vmatprep.subr.mxu0 0.0
    %338 = vmatpush1.xpose.msra.mxu0 0.0
    %339 = vmatprep.subr.mxu0 0.0
    %340 = vmatpush1.xpose.msra.mxu0 0.0
    %341 = vmatprep.subr.mxu0 0.0
    %342 = vmatpush1.xpose.msra.mxu0 0.0
    %343 = vmatprep.subr.mxu0 0.0
    %344 = vmatpush1.xpose.msra.mxu0 0.0
    %345 = vmatprep.subr.mxu0 0.0
    %346 = vmatpush1.xpose.msra.mxu0 0.0
    %347 = vmatprep.subr.mxu0 0.0
    %348 = vmatpush1.xpose.msra.mxu0 0.0
    %349 = vmatprep.subr.mxu0 0.0
    %350 = vmatpush1.xpose.msra.mxu0 0.0
    %351 = vmatprep.subr.mxu0 0.0
    %352 = vmatpush1.xpose.msra.mxu0 0.0
    %353 = vmatprep.subr.mxu0 0.0
    %354 = vmatpush1.xpose.msra.mxu0 0.0
    %355 = vmatprep.subr.mxu0 0.0
    %356 = vmatpush1.xpose.msra.mxu0 0.0
    %357 = vmatprep.subr.mxu0 0.0
    %358 = vmatpush1.xpose.msra.mxu0 0.0
    %359 = vmatprep.subr.mxu0 0.0
    %360 = vmatpush1.xpose.msra.mxu0 0.0
    %361 = vmatprep.subr.mxu0 0.0
    %362 = vmatpush1.xpose.msra.mxu0 0.0
    %363 = vmatprep.subr.mxu0 0.0
    %364 = vmatpush1.xpose.msra.mxu0 0.0
    %365 = vmatprep.subr.mxu0 0.0
    %366 = vmatpush1.xpose.msra.mxu0 0.0
    %367 = vmatprep.subr.mxu0 0.0
    %368 = vmatpush1.xpose.msra.mxu0 0.0
    %369 = vmatprep.subr.mxu0 0.0
    %370 = vmatpush1.xpose.msra.mxu0 0.0
    %371 = vmatprep.subr.mxu0 0.0
    %372 = vmatpush1.xpose.msra.mxu0 0.0
    %373 = vmatprep.subr.mxu0 0.0
    %374 = vmatpush1.xpose.msra.mxu0 0.0
    %375 = vmatprep.mubr.f32.mxu0 0.0
    %376 = vmatmul.mubr.f32.gmra.mrb[0].mxu0 %v264
    %v377 = vpop.f32.mrb[0].mxu0
    %v378 = vadd.f32 %v253, %v377
    %v379 = vpop.f32.mrb[0].mxu0
    %380 = vmatprep.mubr.f32.mxu0 0.0
    %381 = vmatmul.mubr.f32.gmra.mrb[0].mxu0 %v267
    %v382 = vpop.f32.mrb[0].mxu0
    %v383 = vadd.f32 %v254, %v382
    %v384 = vpop.f32.mrb[0].mxu0
    %385 = vmatprep.mubr.f32.mxu0 0.0
    %386 = vmatmul.mubr.f32.gmra.mrb[0].mxu0 %v270
    %v387 = vpop.f32.mrb[0].mxu0
    %v388 = vadd.f32 %v255, %v387
    %v389 = vpop.f32.mrb[0].mxu0
    %390 = vmatprep.mubr.f32.mxu0 0.0
    %391 = vmatmul.mubr.f32.gmra.mrb[0].mxu0 %v273
    %v392 = vpop.f32.mrb[0].mxu0
    %v393 = vadd.f32 %v256, %v392
    %v394 = vpop.f32.mrb[0].mxu0
    %395 = vmatprep.mubr.f32.mxu0 0.0
    %396 = vmatmul.mubr.f32.gmra.mrb[0].mxu0 %v276
    %v397 = vpop.f32.mrb[0].mxu0
    %v398 = vadd.f32 %v257, %v397
    %v399 = vpop.f32.mrb[0].mxu0
    %400 = vmatprep.mubr.f32.mxu0 0.0
    %401 = vmatmul.mubr.f32.gmra.mrb[0].mxu0 %v279
    %v402 = vpop.f32.mrb[0].mxu0
    %v403 = vadd.f32 %v258, %v402
    %v404 = vpop.f32.mrb[0].mxu0
    %405 = vmatprep.mubr.f32.mxu0 0.0
    %406 = vmatmul.mubr.f32.gmra.mrb[0].mxu0 %v282
    %v407 = vpop.f32.mrb[0].mxu0
    %v408 = vadd.f32 %v259, %v407
    %v409 = vpop.f32.mrb[0].mxu0
    %410 = vmatprep.mubr.f32.mxu0 0.0
    %411 = vmatmul.mubr.f32.gmra.mrb[0].mxu0 %v285
    %v412 = vpop.f32.mrb[0].mxu0
    %v413 = vadd.f32 %v260, %v412
    %v414 = vpop.f32.mrb[0].mxu0
    %415 = vdwg.mxu0
    %vm416 = vcmask 523264
    %v417 = vsel %vm416, %v378, -inf
    %418 = vmax.xlane.f32.xlu0 %v417
    %v419 = vpop.xlane.xlu0 %418
    %v420 = vsel %vm416, %v383, -inf
    %421 = vmax.xlane.f32.xlu0 %v420
    %v422 = vpop.xlane.xlu0 %421
    %v423 = vsel %vm416, %v388, -inf
    %424 = vmax.xlane.f32.xlu0 %v423
    %v425 = vpop.xlane.xlu0 %424
    %v426 = vsel %vm416, %v393, -inf
    %427 = vmax.xlane.f32.xlu0 %v426
    %v428 = vpop.xlane.xlu0 %427
    %v429 = vsel %vm416, %v398, -inf
    %430 = vmax.xlane.f32.xlu0 %v429
    %v431 = vpop.xlane.xlu0 %430
    %v432 = vsel %vm416, %v403, -inf
    %433 = vmax.xlane.f32.xlu0 %v432
    %v434 = vpop.xlane.xlu0 %433
    %v435 = vsel %vm416, %v408, -inf
    %436 = vmax.xlane.f32.xlu0 %v435
    %v437 = vpop.xlane.xlu0 %436
    %v438 = vsel %vm416, %v413, -inf
    %439 = vmax.xlane.f32.xlu0 %v438
    %v440 = vpop.xlane.xlu0 %439
    %v441 = vsub.f32 %v378, %v419
    %v442 = vsub.f32 %v383, %v422
    %v443 = vsub.f32 %v388, %v425
    %v444 = vsub.f32 %v393, %v428
    %v445 = vsub.f32 %v398, %v431
    %v446 = vsub.f32 %v403, %v434
    %v447 = vsub.f32 %v408, %v437
    %v448 = vsub.f32 %v413, %v440
    %v449 = vmul.f32 %v441, 1.442695
    %v450 = vpow.pop %v449
    %v451 = vmul.f32 %v442, 1.442695
    %v452 = vpow.pop %v451
    %v453 = vmul.f32 %v443, 1.442695
    %v454 = vpow.pop %v453
    %v455 = vmul.f32 %v444, 1.442695
    %v456 = vpow.pop %v455
    %v457 = vmul.f32 %v445, 1.442695
    %v458 = vpow.pop %v457
    %v459 = vmul.f32 %v446, 1.442695
    %v460 = vpow.pop %v459
    %v461 = vmul.f32 %v447, 1.442695
    %v462 = vpow.pop %v461
    %v463 = vmul.f32 %v448, 1.442695
    %v464 = vpow.pop %v463
    %v465 = vsel %vm416, %v450, 0.0
    %466 = vadd.xlane.f32.xlu0 %v465
    %v467 = vpop.xlane.xlu0 %466
    %v468 = vsel %vm416, %v452, 0.0
    %469 = vadd.xlane.f32.xlu0 %v468
    %v470 = vpop.xlane.xlu0 %469
    %v471 = vsel %vm416, %v454, 0.0
    %472 = vadd.xlane.f32.xlu0 %v471
    %v473 = vpop.xlane.xlu0 %472
    %v474 = vsel %vm416, %v456, 0.0
    %475 = vadd.xlane.f32.xlu0 %v474
    %v476 = vpop.xlane.xlu0 %475
    %v477 = vsel %vm416, %v458, 0.0
    %478 = vadd.xlane.f32.xlu0 %v477
    %v479 = vpop.xlane.xlu0 %478
    %v480 = vsel %vm416, %v460, 0.0
    %481 = vadd.xlane.f32.xlu0 %v480
    %v482 = vpop.xlane.xlu0 %481
    %v483 = vsel %vm416, %v462, 0.0
    %484 = vadd.xlane.f32.xlu0 %v483
    %v485 = vpop.xlane.xlu0 %484
    %v486 = vsel %vm416, %v464, 0.0
    %487 = vadd.xlane.f32.xlu0 %v486
    %v488 = vpop.xlane.xlu0 %487
    %v489 = vrcp.pop %v467
    %v490 = vmul.f32 %v450, %v489
    %v491 = vrcp.pop %v470
    %v492 = vmul.f32 %v452, %v491
    %v493 = vrcp.pop %v473
    %v494 = vmul.f32 %v454, %v493
    %v495 = vrcp.pop %v476
    %v496 = vmul.f32 %v456, %v495
    %v497 = vrcp.pop %v479
    %v498 = vmul.f32 %v458, %v497
    %v499 = vrcp.pop %v482
    %v500 = vmul.f32 %v460, %v499
    %v501 = vrcp.pop %v485
    %v502 = vmul.f32 %v462, %v501
    %v503 = vrcp.pop %v488
    %v504 = vmul.f32 %v464, %v503
    %v505 = vadd.f32 %v490, 0.0
    %v506 = vadd.f32 %v492, 0.0
    %v507 = vadd.f32 %v494, 0.0
    %v508 = vadd.f32 %v496, 0.0
    %v509 = vadd.f32 %v498, 0.0
    %v510 = vadd.f32 %v500, 0.0
    %v511 = vadd.f32 %v502, 0.0
    %v512 = vadd.f32 %v504, 0.0
    %v514 = vsel %vm416, %v261, 0
    %516 = vmatprep.subr.mxu0 0.0
    %517 = vmatpush1.msra.mxu0 %v490
    %518 = vmatprep.subr.mxu0 0.0
    %519 = vmatpush1.msra.mxu0 %v492
    %520 = vmatprep.subr.mxu0 0.0
    %521 = vmatpush1.msra.mxu0 %v494
    %522 = vmatprep.subr.mxu0 0.0
    %523 = vmatpush1.msra.mxu0 %v496
    %524 = vmatprep.subr.mxu0 0.0
    %525 = vmatpush1.msra.mxu0 %v498
    %526 = vmatprep.subr.mxu0 0.0
    %527 = vmatpush1.msra.mxu0 %v500
    %528 = vmatprep.subr.mxu0 0.0
    %529 = vmatpush1.msra.mxu0 %v502
    %530 = vmatprep.subr.mxu0 0.0
    %531 = vmatpush1.msra.mxu0 %v504
    %532 = vmatprep.subr.mxu0 0.0
    %533 = vmatpush1.msra.mxu0 0.0
    %534 = vmatprep.subr.mxu0 0.0
    %535 = vmatpush1.msra.mxu0 0.0
    %536 = vmatprep.subr.mxu0 0.0
    %537 = vmatpush1.msra.mxu0 0.0
    %538 = vmatprep.subr.mxu0 0.0
    %539 = vmatpush1.msra.mxu0 0.0
    %540 = vmatprep.subr.mxu0 0.0
    %541 = vmatpush1.msra.mxu0 0.0
    %542 = vmatprep.subr.mxu0 0.0
    %543 = vmatpush1.msra.mxu0 0.0
    %544 = vmatprep.subr.mxu0 0.0
    %545 = vmatpush1.msra.mxu0 0.0
    %546 = vmatprep.subr.mxu0 0.0
    %547 = vmatpush1.msra.mxu0 0.0
    %548 = vmatprep.subr.mxu0 0.0
    %549 = vmatpush1.msra.mxu0 0.0
    %550 = vmatprep.subr.mxu0 0.0
    %551 = vmatpush1.msra.mxu0 0.0
    %552 = vmatprep.subr.mxu0 0.0
    %553 = vmatpush1.msra.mxu0 0.0
    %554 = vmatprep.subr.mxu0 0.0
    %555 = vmatpush1.msra.mxu0 0.0
    %556 = vmatprep.subr.mxu0 0.0
    %557 = vmatpush1.msra.mxu0 0.0
    %558 = vmatprep.subr.mxu0 0.0
    %559 = vmatpush1.msra.mxu0 0.0
    %560 = vmatprep.subr.mxu0 0.0
    %561 = vmatpush1.msra.mxu0 0.0
    %562 = vmatprep.subr.mxu0 0.0
    %563 = vmatpush1.msra.mxu0 0.0
    %564 = vmatprep.subr.mxu0 0.0
    %565 = vmatpush1.msra.mxu0 0.0
    %566 = vmatprep.subr.mxu0 0.0
    %567 = vmatpush1.msra.mxu0 0.0
    %568 = vmatprep.subr.mxu0 0.0
    %569 = vmatpush1.msra.mxu0 0.0
    %570 = vmatprep.subr.mxu0 0.0
    %571 = vmatpush1.msra.mxu0 0.0
    %572 = vmatprep.subr.mxu0 0.0
    %573 = vmatpush1.msra.mxu0 0.0
    %574 = vmatprep.subr.mxu0 0.0
    %575 = vmatpush1.msra.mxu0 0.0
    %576 = vmatprep.subr.mxu0 0.0
    %577 = vmatpush1.msra.mxu0 0.0
    %578 = vmatprep.subr.mxu0 0.0
    %579 = vmatpush1.msra.mxu0 0.0
    %580 = vmatprep.mubr.f32.mxu0 0.0
    %581 = vmatmul.mubr.f32.gmra.mrb[0].mxu0 %v514
    %v582 = vpop.f32.mrb[0].mxu0
    %v583 = vadd.f32 0.0, %v582
    %v584 = vpop.f32.mrb[0].mxu0
    %585 = vdwg.mxu0
    %v587 = vsel %vm416, %v583, 0
    %589 = vmatprep.subr.mxu0 0.0
    %590 = vmatpush1.msra.mxu0 %v245
    %591 = vmatprep.subr.mxu0 0.0
    %592 = vmatpush1.msra.mxu0 %v246
    %593 = vmatprep.subr.mxu0 0.0
    %594 = vmatpush1.msra.mxu0 %v247
    %595 = vmatprep.subr.mxu0 0.0
    %596 = vmatpush1.msra.mxu0 %v248
    %597 = vmatprep.subr.mxu0 0.0
    %598 = vmatpush1.msra.mxu0 %v249
    %599 = vmatprep.subr.mxu0 0.0
    %600 = vmatpush1.msra.mxu0 %v250
    %601 = vmatprep.subr.mxu0 0.0
    %602 = vmatpush1.msra.mxu0 %v251
    %603 = vmatprep.subr.mxu0 0.0
    %604 = vmatpush1.msra.mxu0 %v252
    %605 = vmatprep.subr.mxu0 0.0
    %606 = vmatpush1.msra.mxu0 0.0
    %607 = vmatprep.subr.mxu0 0.0
    %608 = vmatpush1.msra.mxu0 0.0
    %609 = vmatprep.subr.mxu0 0.0
    %610 = vmatpush1.msra.mxu0 0.0
    %611 = vmatprep.subr.mxu0 0.0
    %612 = vmatpush1.msra.mxu0 0.0
    %613 = vmatprep.subr.mxu0 0.0
    %614 = vmatpush1.msra.mxu0 0.0
    %615 = vmatprep.subr.mxu0 0.0
    %616 = vmatpush1.msra.mxu0 0.0
    %617 = vmatprep.subr.mxu0 0.0
    %618 = vmatpush1.msra.mxu0 0.0
    %619 = vmatprep.subr.mxu0 0.0
    %620 = vmatpush1.msra.mxu0 0.0
    %621 = vmatprep.subr.mxu0 0.0
    %622 = vmatpush1.msra.mxu0 0.0
    %623 = vmatprep.subr.mxu0 0.0
    %624 = vmatpush1.msra.mxu0 0.0
    %625 = vmatprep.subr.mxu0 0.0
    %626 = vmatpush1.msra.mxu0 0.0
    %627 = vmatprep.subr.mxu0 0.0
    %628 = vmatpush1.msra.mxu0 0.0
    %629 = vmatprep.subr.mxu0 0.0
    %630 = vmatpush1.msra.mxu0 0.0
    %631 = vmatprep.subr.mxu0 0.0
    %632 = vmatpush1.msra.mxu0 0.0
    %633 = vmatprep.subr.mxu0 0.0
    %634 = vmatpush1.msra.mxu0 0.0
    %635 = vmatprep.subr.mxu0 0.0
    %636 = vmatpush1.msra.mxu0 0.0
    %637 = vmatprep.subr.mxu0 0.0
    %638 = vmatpush1.msra.mxu0 0.0
    %639 = vmatprep.subr.mxu0 0.0
    %640 = vmatpush1.msra.mxu0 0.0
    %641 = vmatprep.subr.mxu0 0.0
    %642 = vmatpush1.msra.mxu0 0.0
    %643 = vmatprep.subr.mxu0 0.0
    %644 = vmatpush1.msra.mxu0 0.0
    %645 = vmatprep.subr.mxu0 0.0
    %646 = vmatpush1.msra.mxu0 0.0
    %647 = vmatprep.subr.mxu0 0.0
    %648 = vmatpush1.msra.mxu0 0.0
    %649 = vmatprep.subr.mxu0 0.0
    %650 = vmatpush1.msra.mxu0 0.0
    %651 = vmatprep.subr.mxu0 0.0
    %652 = vmatpush1.msra.mxu0 0.0
    %653 = vmatprep.mubr.f32.mxu0 0.0
    %654 = vmatmul.mubr.f32.gmra.mrb[0].mxu0 %v587
    %v655 = vpop.f32.mrb[0].mxu0
    %v656 = vadd.f32 0.0, %v655
    %v657 = vpop.f32.mrb[0].mxu0
    %658 = vdwg.mxu0
    %659 = vrot.lane.b32.xlu0 %v185, 120
    %v660 = vpop.permute.xlu0 %659
    %661 = vrot.lane.b32.xlu0 %v186, 120
    %v662 = vpop.permute.xlu0 %661
    %663 = vrot.lane.b32.xlu0 %v187, 120
    %v664 = vpop.permute.xlu0 %663
    %665 = vrot.lane.b32.xlu0 %v188, 120
    %v666 = vpop.permute.xlu0 %665
    %667 = vrot.lane.b32.xlu0 %v189, 120
    %v668 = vpop.permute.xlu0 %667
    %669 = vrot.lane.b32.xlu0 %v190, 120
    %v670 = vpop.permute.xlu0 %669
    %671 = vrot.lane.b32.xlu0 %v191, 120
    %v672 = vpop.permute.xlu0 %671
    %673 = vrot.lane.b32.xlu0 %v192, 120
    %v674 = vpop.permute.xlu0 %673
    %675 = vrot.lane.b32.xlu0 %v215, 120
    %v676 = vpop.permute.xlu0 %675
    %677 = vrot.lane.b32.xlu0 %v216, 120
    %v678 = vpop.permute.xlu0 %677
    %679 = vrot.lane.b32.xlu0 %v217, 120
    %v680 = vpop.permute.xlu0 %679
    %681 = vrot.lane.b32.xlu0 %v218, 120
    %v682 = vpop.permute.xlu0 %681
    %683 = vrot.lane.b32.xlu0 %v219, 120
    %v684 = vpop.permute.xlu0 %683
    %685 = vrot.lane.b32.xlu0 %v220, 120
    %v686 = vpop.permute.xlu0 %685
    %687 = vrot.lane.b32.xlu0 %v221, 120
    %v688 = vpop.permute.xlu0 %687
    %689 = vrot.lane.b32.xlu0 %v222, 120
    %v690 = vpop.permute.xlu0 %689
    %v691 = vsel %vm262, %v660, 0
    %v693 = vsel %vm262, %v662, 0
    %v695 = vsel %vm262, %v664, 0
    %v697 = vsel %vm262, %v666, 0
    %v699 = vsel %vm262, %v668, 0
    %v701 = vsel %vm262, %v670, 0
    %v703 = vsel %vm262, %v672, 0
    %v705 = vsel %vm262, %v674, 0
    %v707 = vsel %vm262, %v676, 0
    %v709 = vsel %vm262, %v678, 0
    %v711 = vsel %vm262, %v680, 0
    %v713 = vsel %vm262, %v682, 0
    %v715 = vsel %vm262, %v684, 0
    %v717 = vsel %vm262, %v686, 0
    %v719 = vsel %vm262, %v688, 0
    %v721 = vsel %vm262, %v690, 0
    %723 = vmatprep.subr.mxu0 0.0
    %724 = vmatpush1.xpose.msra.mxu0 %v707
    %725 = vmatprep.subr.mxu0 0.0
    %726 = vmatpush1.xpose.msra.mxu0 %v709
    %727 = vmatprep.subr.mxu0 0.0
    %728 = vmatpush1.xpose.msra.mxu0 %v711
    %729 = vmatprep.subr.mxu0 0.0
    %730 = vmatpush1.xpose.msra.mxu0 %v713
    %731 = vmatprep.subr.mxu0 0.0
    %732 = vmatpush1.xpose.msra.mxu0 %v715
    %733 = vmatprep.subr.mxu0 0.0
    %734 = vmatpush1.xpose.msra.mxu0 %v717
    %735 = vmatprep.subr.mxu0 0.0
    %736 = vmatpush1.xpose.msra.mxu0 %v719
    %737 = vmatprep.subr.mxu0 0.0
    %738 = vmatpush1.xpose.msra.mxu0 %v721
    %739 = vmatprep.subr.mxu0 0.0
    %740 = vmatpush1.xpose.msra.mxu0 0.0
    %741 = vmatprep.subr.mxu0 0.0
    %742 = vmatpush1.xpose.msra.mxu0 0.0
    %743 = vmatprep.subr.mxu0 0.0
    %744 = vmatpush1.xpose.msra.mxu0 0.0
    %745 = vmatprep.subr.mxu0 0.0
    %746 = vmatpush1.xpose.msra.mxu0 0.0
    %747 = vmatprep.subr.mxu0 0.0
    %748 = vmatpush1.xpose.msra.mxu0 0.0
    %749 = vmatprep.subr.mxu0 0.0
    %750 = vmatpush1.xpose.msra.mxu0 0.0
    %751 = vmatprep.subr.mxu0 0.0
    %752 = vmatpush1.xpose.msra.mxu0 0.0
    %753 = vmatprep.subr.mxu0 0.0
    %754 = vmatpush1.xpose.msra.mxu0 0.0
    %755 = vmatprep.subr.mxu0 0.0
    %756 = vmatpush1.xpose.msra.mxu0 0.0
    %757 = vmatprep.subr.mxu0 0.0
    %758 = vmatpush1.xpose.msra.mxu0 0.0
    %759 = vmatprep.subr.mxu0 0.0
    %760 = vmatpush1.xpose.msra.mxu0 0.0
    %761 = vmatprep.subr.mxu0 0.0
    %762 = vmatpush1.xpose.msra.mxu0 0.0
    %763 = vmatprep.subr.mxu0 0.0
    %764 = vmatpush1.xpose.msra.mxu0 0.0
    %765 = vmatprep.subr.mxu0 0.0
    %766 = vmatpush1.xpose.msra.mxu0 0.0
    %767 = vmatprep.subr.mxu0 0.0
    %768 = vmatpush1.xpose.msra.mxu0 0.0
    %769 = vmatprep.subr.mxu0 0.0
    %770 = vmatpush1.xpose.msra.mxu0 0.0
    %771 = vmatprep.subr.mxu0 0.0
    %772 = vmatpush1.xpose.msra.mxu0 0.0
    %773 = vmatprep.subr.mxu0 0.0
    %774 = vmatpush1.xpose.msra.mxu0 0.0
    %775 = vmatprep.subr.mxu0 0.0
    %776 = vmatpush1.xpose.msra.mxu0 0.0
    %777 = vmatprep.subr.mxu0 0.0
    %778 = vmatpush1.xpose.msra.mxu0 0.0
    %779 = vmatprep.subr.mxu0 0.0
    %780 = vmatpush1.xpose.msra.mxu0 0.0
    %781 = vmatprep.subr.mxu0 0.0
    %782 = vmatpush1.xpose.msra.mxu0 0.0
    %783 = vmatprep.subr.mxu0 0.0
    %784 = vmatpush1.xpose.msra.mxu0 0.0
    %785 = vmatprep.subr.mxu0 0.0
    %786 = vmatpush1.xpose.msra.mxu0 0.0
    %787 = vmatprep.mubr.f32.mxu0 0.0
    %788 = vmatmul.mubr.f32.gmra.mrb[0].mxu0 %v691
    %v789 = vpop.f32.mrb[0].mxu0
    %v790 = vadd.f32 %v253, %v789
    %v791 = vpop.f32.mrb[0].mxu0
    %792 = vmatprep.mubr.f32.mxu0 0.0
    %793 = vmatmul.mubr.f32.gmra.mrb[0].mxu0 %v693
    %v794 = vpop.f32.mrb[0].mxu0
    %v795 = vadd.f32 %v254, %v794
    %v796 = vpop.f32.mrb[0].mxu0
    %797 = vmatprep.mubr.f32.mxu0 0.0
    %798 = vmatmul.mubr.f32.gmra.mrb[0].mxu0 %v695
    %v799 = vpop.f32.mrb[0].mxu0
    %v800 = vadd.f32 %v255, %v799
    %v801 = vpop.f32.mrb[0].mxu0
    %802 = vmatprep.mubr.f32.mxu0 0.0
    %803 = vmatmul.mubr.f32.gmra.mrb[0].mxu0 %v697
    %v804 = vpop.f32.mrb[0].mxu0
    %v805 = vadd.f32 %v256, %v804
    %v806 = vpop.f32.mrb[0].mxu0
    %807 = vmatprep.mubr.f32.mxu0 0.0
    %808 = vmatmul.mubr.f32.gmra.mrb[0].mxu0 %v699
    %v809 = vpop.f32.mrb[0].mxu0
    %v810 = vadd.f32 %v257, %v809
    %v811 = vpop.f32.mrb[0].mxu0
    %812 = vmatprep.mubr.f32.mxu0 0.0
    %813 = vmatmul.mubr.f32.gmra.mrb[0].mxu0 %v701
    %v814 = vpop.f32.mrb[0].mxu0
    %v815 = vadd.f32 %v258, %v814
    %v816 = vpop.f32.mrb[0].mxu0
    %817 = vmatprep.mubr.f32.mxu0 0.0
    %818 = vmatmul.mubr.f32.gmra.mrb[0].mxu0 %v703
    %v819 = vpop.f32.mrb[0].mxu0
    %v820 = vadd.f32 %v259, %v819
    %v821 = vpop.f32.mrb[0].mxu0
    %822 = vmatprep.mubr.f32.mxu0 0.0
    %823 = vmatmul.mubr.f32.gmra.mrb[0].mxu0 %v705
    %v824 = vpop.f32.mrb[0].mxu0
    %v825 = vadd.f32 %v260, %v824
    %v826 = vpop.f32.mrb[0].mxu0
    %827 = vdwg.mxu0
    %v828 = vsel %vm416, %v790, -inf
    %829 = vmax.xlane.f32.xlu0 %v828
    %v830 = vpop.xlane.xlu0 %829
    %v831 = vsel %vm416, %v795, -inf
    %832 = vmax.xlane.f32.xlu0 %v831
    %v833 = vpop.xlane.xlu0 %832
    %v834 = vsel %vm416, %v800, -inf
    %835 = vmax.xlane.f32.xlu0 %v834
    %v836 = vpop.xlane.xlu0 %835
    %v837 = vsel %vm416, %v805, -inf
    %838 = vmax.xlane.f32.xlu0 %v837
    %v839 = vpop.xlane.xlu0 %838
    %v840 = vsel %vm416, %v810, -inf
    %841 = vmax.xlane.f32.xlu0 %v840
    %v842 = vpop.xlane.xlu0 %841
    %v843 = vsel %vm416, %v815, -inf
    %844 = vmax.xlane.f32.xlu0 %v843
    %v845 = vpop.xlane.xlu0 %844
    %v846 = vsel %vm416, %v820, -inf
    %847 = vmax.xlane.f32.xlu0 %v846
    %v848 = vpop.xlane.xlu0 %847
    %v849 = vsel %vm416, %v825, -inf
    %850 = vmax.xlane.f32.xlu0 %v849
    %v851 = vpop.xlane.xlu0 %850
    %v852 = vsub.f32 %v790, %v830
    %v853 = vsub.f32 %v795, %v833
    %v854 = vsub.f32 %v800, %v836
    %v855 = vsub.f32 %v805, %v839
    %v856 = vsub.f32 %v810, %v842
    %v857 = vsub.f32 %v815, %v845
    %v858 = vsub.f32 %v820, %v848
    %v859 = vsub.f32 %v825, %v851
    %v860 = vmul.f32 %v852, 1.442695
    %v861 = vpow.pop %v860
    %v862 = vmul.f32 %v853, 1.442695
    %v863 = vpow.pop %v862
    %v864 = vmul.f32 %v854, 1.442695
    %v865 = vpow.pop %v864
    %v866 = vmul.f32 %v855, 1.442695
    %v867 = vpow.pop %v866
    %v868 = vmul.f32 %v856, 1.442695
    %v869 = vpow.pop %v868
    %v870 = vmul.f32 %v857, 1.442695
    %v871 = vpow.pop %v870
    %v872 = vmul.f32 %v858, 1.442695
    %v873 = vpow.pop %v872
    %v874 = vmul.f32 %v859, 1.442695
    %v875 = vpow.pop %v874
    %v876 = vsel %vm416, %v861, 0.0
    %877 = vadd.xlane.f32.xlu0 %v876
    %v878 = vpop.xlane.xlu0 %877
    %v879 = vsel %vm416, %v863, 0.0
    %880 = vadd.xlane.f32.xlu0 %v879
    %v881 = vpop.xlane.xlu0 %880
    %v882 = vsel %vm416, %v865, 0.0
    %883 = vadd.xlane.f32.xlu0 %v882
    %v884 = vpop.xlane.xlu0 %883
    %v885 = vsel %vm416, %v867, 0.0
    %886 = vadd.xlane.f32.xlu0 %v885
    %v887 = vpop.xlane.xlu0 %886
    %v888 = vsel %vm416, %v869, 0.0
    %889 = vadd.xlane.f32.xlu0 %v888
    %v890 = vpop.xlane.xlu0 %889
    %v891 = vsel %vm416, %v871, 0.0
    %892 = vadd.xlane.f32.xlu0 %v891
    %v893 = vpop.xlane.xlu0 %892
    %v894 = vsel %vm416, %v873, 0.0
    %895 = vadd.xlane.f32.xlu0 %v894
    %v896 = vpop.xlane.xlu0 %895
    %v897 = vsel %vm416, %v875, 0.0
    %898 = vadd.xlane.f32.xlu0 %v897
    %v899 = vpop.xlane.xlu0 %898
    %v900 = vrcp.pop %v878
    %v901 = vmul.f32 %v861, %v900
    %v902 = vrcp.pop %v881
    %v903 = vmul.f32 %v863, %v902
    %v904 = vrcp.pop %v884
    %v905 = vmul.f32 %v865, %v904
    %v906 = vrcp.pop %v887
    %v907 = vmul.f32 %v867, %v906
    %v908 = vrcp.pop %v890
    %v909 = vmul.f32 %v869, %v908
    %v910 = vrcp.pop %v893
    %v911 = vmul.f32 %v871, %v910
    %v912 = vrcp.pop %v896
    %v913 = vmul.f32 %v873, %v912
    %v914 = vrcp.pop %v899
    %v915 = vmul.f32 %v875, %v914
    %v916 = vadd.f32 %v505, %v901
    %v917 = vadd.f32 %v506, %v903
    %v918 = vadd.f32 %v507, %v905
    %v919 = vadd.f32 %v508, %v907
    %v920 = vadd.f32 %v509, %v909
    %v921 = vadd.f32 %v510, %v911
    %v922 = vadd.f32 %v511, %v913
    %v923 = vadd.f32 %v512, %v915
    %924 = vmatprep.subr.mxu0 0.0
    %925 = vmatpush1.msra.mxu0 %v901
    %926 = vmatprep.subr.mxu0 0.0
    %927 = vmatpush1.msra.mxu0 %v903
    %928 = vmatprep.subr.mxu0 0.0
    %929 = vmatpush1.msra.mxu0 %v905
    %930 = vmatprep.subr.mxu0 0.0
    %931 = vmatpush1.msra.mxu0 %v907
    %932 = vmatprep.subr.mxu0 0.0
    %933 = vmatpush1.msra.mxu0 %v909
    %934 = vmatprep.subr.mxu0 0.0
    %935 = vmatpush1.msra.mxu0 %v911
    %936 = vmatprep.subr.mxu0 0.0
    %937 = vmatpush1.msra.mxu0 %v913
    %938 = vmatprep.subr.mxu0 0.0
    %939 = vmatpush1.msra.mxu0 %v915
    %940 = vmatprep.subr.mxu0 0.0
    %941 = vmatpush1.msra.mxu0 0.0
    %942 = vmatprep.subr.mxu0 0.0
    %943 = vmatpush1.msra.mxu0 0.0
    %944 = vmatprep.subr.mxu0 0.0
    %945 = vmatpush1.msra.mxu0 0.0
    %946 = vmatprep.subr.mxu0 0.0
    %947 = vmatpush1.msra.mxu0 0.0
    %948 = vmatprep.subr.mxu0 0.0
    %949 = vmatpush1.msra.mxu0 0.0
    %950 = vmatprep.subr.mxu0 0.0
    %951 = vmatpush1.msra.mxu0 0.0
    %952 = vmatprep.subr.mxu0 0.0
    %953 = vmatpush1.msra.mxu0 0.0
    %954 = vmatprep.subr.mxu0 0.0
    %955 = vmatpush1.msra.mxu0 0.0
    %956 = vmatprep.subr.mxu0 0.0
    %957 = vmatpush1.msra.mxu0 0.0
    %958 = vmatprep.subr.mxu0 0.0
    %959 = vmatpush1.msra.mxu0 0.0
    %960 = vmatprep.subr.mxu0 0.0
    %961 = vmatpush1.msra.mxu0 0.0
    %962 = vmatprep.subr.mxu0 0.0
    %963 = vmatpush1.msra.mxu0 0.0
    %964 = vmatprep.subr.mxu0 0.0
    %965 = vmatpush1.msra.mxu0 0.0
    %966 = vmatprep.subr.mxu0 0.0
    %967 = vmatpush1.msra.mxu0 0.0
    %968 = vmatprep.subr.mxu0 0.0
    %969 = vmatpush1.msra.mxu0 0.0
    %970 = vmatprep.subr.mxu0 0.0
    %971 = vmatpush1.msra.mxu0 0.0
    %972 = vmatprep.subr.mxu0 0.0
    %973 = vmatpush1.msra.mxu0 0.0
    %974 = vmatprep.subr.mxu0 0.0
    %975 = vmatpush1.msra.mxu0 0.0
    %976 = vmatprep.subr.mxu0 0.0
    %977 = vmatpush1.msra.mxu0 0.0
    %978 = vmatprep.subr.mxu0 0.0
    %979 = vmatpush1.msra.mxu0 0.0
    %980 = vmatprep.subr.mxu0 0.0
    %981 = vmatpush1.msra.mxu0 0.0
    %982 = vmatprep.subr.mxu0 0.0
    %983 = vmatpush1.msra.mxu0 0.0
    %984 = vmatprep.subr.mxu0 0.0
    %985 = vmatpush1.msra.mxu0 0.0
    %986 = vmatprep.subr.mxu0 0.0
    %987 = vmatpush1.msra.mxu0 0.0
    %988 = vmatprep.mubr.f32.mxu0 0.0
    %989 = vmatmul.mubr.f32.gmra.mrb[0].mxu0 %v514
    %v990 = vpop.f32.mrb[0].mxu0
    %v991 = vadd.f32 0.0, %v990
    %v992 = vpop.f32.mrb[0].mxu0
    %993 = vdwg.mxu0
    %1002 = vrot.lane.b32.xlu0 %v245, 120
    %v1003 = vpop.permute.xlu0 %1002
    %1004 = vrot.lane.b32.xlu0 %v246, 120
    %v1005 = vpop.permute.xlu0 %1004
    %1006 = vrot.lane.b32.xlu0 %v247, 120
    %v1007 = vpop.permute.xlu0 %1006
    %1008 = vrot.lane.b32.xlu0 %v248, 120
    %v1009 = vpop.permute.xlu0 %1008
    %1010 = vrot.lane.b32.xlu0 %v249, 120
    %v1011 = vpop.permute.xlu0 %1010
    %1012 = vrot.lane.b32.xlu0 %v250, 120
    %v1013 = vpop.permute.xlu0 %1012
    %1014 = vrot.lane.b32.xlu0 %v251, 120
    %v1015 = vpop.permute.xlu0 %1014
    %1016 = vrot.lane.b32.xlu0 %v252, 120
    %v1017 = vpop.permute.xlu0 %1016
    %v1027 = vsel %vm416, %v991, 0
    %1029 = vmatprep.subr.mxu0 0.0
    %1030 = vmatpush1.msra.mxu0 %v1003
    %1031 = vmatprep.subr.mxu0 0.0
    %1032 = vmatpush1.msra.mxu0 %v1005
    %1033 = vmatprep.subr.mxu0 0.0
    %1034 = vmatpush1.msra.mxu0 %v1007
    %1035 = vmatprep.subr.mxu0 0.0
    %1036 = vmatpush1.msra.mxu0 %v1009
    %1037 = vmatprep.subr.mxu0 0.0
    %1038 = vmatpush1.msra.mxu0 %v1011
    %1039 = vmatprep.subr.mxu0 0.0
    %1040 = vmatpush1.msra.mxu0 %v1013
    %1041 = vmatprep.subr.mxu0 0.0
    %1042 = vmatpush1.msra.mxu0 %v1015
    %1043 = vmatprep.subr.mxu0 0.0
    %1044 = vmatpush1.msra.mxu0 %v1017
    %1045 = vmatprep.subr.mxu0 0.0
    %1046 = vmatpush1.msra.mxu0 0.0
    %1047 = vmatprep.subr.mxu0 0.0
    %1048 = vmatpush1.msra.mxu0 0.0
    %1049 = vmatprep.subr.mxu0 0.0
    %1050 = vmatpush1.msra.mxu0 0.0
    %1051 = vmatprep.subr.mxu0 0.0
    %1052 = vmatpush1.msra.mxu0 0.0
    %1053 = vmatprep.subr.mxu0 0.0
    %1054 = vmatpush1.msra.mxu0 0.0
    %1055 = vmatprep.subr.mxu0 0.0
    %1056 = vmatpush1.msra.mxu0 0.0
    %1057 = vmatprep.subr.mxu0 0.0
    %1058 = vmatpush1.msra.mxu0 0.0
    %1059 = vmatprep.subr.mxu0 0.0
    %1060 = vmatpush1.msra.mxu0 0.0
    %1061 = vmatprep.subr.mxu0 0.0
    %1062 = vmatpush1.msra.mxu0 0.0
    %1063 = vmatprep.subr.mxu0 0.0
    %1064 = vmatpush1.msra.mxu0 0.0
    %1065 = vmatprep.subr.mxu0 0.0
    %1066 = vmatpush1.msra.mxu0 0.0
    %1067 = vmatprep.subr.mxu0 0.0
    %1068 = vmatpush1.msra.mxu0 0.0
    %1069 = vmatprep.subr.mxu0 0.0
    %1070 = vmatpush1.msra.mxu0 0.0
    %1071 = vmatprep.subr.mxu0 0.0
    %1072 = vmatpush1.msra.mxu0 0.0
    %1073 = vmatprep.subr.mxu0 0.0
    %1074 = vmatpush1.msra.mxu0 0.0
    %1075 = vmatprep.subr.mxu0 0.0
    %1076 = vmatpush1.msra.mxu0 0.0
    %1077 = vmatprep.subr.mxu0 0.0
    %1078 = vmatpush1.msra.mxu0 0.0
    %1079 = vmatprep.subr.mxu0 0.0
    %1080 = vmatpush1.msra.mxu0 0.0
    %1081 = vmatprep.subr.mxu0 0.0
    %1082 = vmatpush1.msra.mxu0 0.0
    %1083 = vmatprep.subr.mxu0 0.0
    %1084 = vmatpush1.msra.mxu0 0.0
    %1085 = vmatprep.subr.mxu0 0.0
    %1086 = vmatpush1.msra.mxu0 0.0
    %1087 = vmatprep.subr.mxu0 0.0
    %1088 = vmatpush1.msra.mxu0 0.0
    %1089 = vmatprep.subr.mxu0 0.0
    %1090 = vmatpush1.msra.mxu0 0.0
    %1091 = vmatprep.subr.mxu0 0.0
    %1092 = vmatpush1.msra.mxu0 0.0
    %1093 = vmatprep.mubr.f32.mxu0 0.0
    %1094 = vmatmul.mubr.f32.gmra.mrb[0].mxu0 %v1027
    %v1095 = vpop.f32.mrb[0].mxu0
    %v1096 = vadd.f32 0.0, %v1095
    %v1097 = vpop.f32.mrb[0].mxu0
    %1098 = vdwg.mxu0
    %1099 = vrot.lane.b32.xlu0 %v185, 112
    %v1100 = vpop.permute.xlu0 %1099
    %1101 = vrot.lane.b32.xlu0 %v186, 112
    %v1102 = vpop.permute.xlu0 %1101
    %1103 = vrot.lane.b32.xlu0 %v187, 112
    %v1104 = vpop.permute.xlu0 %1103
    %1105 = vrot.lane.b32.xlu0 %v188, 112
    %v1106 = vpop.permute.xlu0 %1105
    %1107 = vrot.lane.b32.xlu0 %v189, 112
    %v1108 = vpop.permute.xlu0 %1107
    %1109 = vrot.lane.b32.xlu0 %v190, 112
    %v1110 = vpop.permute.xlu0 %1109
    %1111 = vrot.lane.b32.xlu0 %v191, 112
    %v1112 = vpop.permute.xlu0 %1111
    %1113 = vrot.lane.b32.xlu0 %v192, 112
    %v1114 = vpop.permute.xlu0 %1113
    %1115 = vrot.lane.b32.xlu0 %v215, 112
    %v1116 = vpop.permute.xlu0 %1115
    %1117 = vrot.lane.b32.xlu0 %v216, 112
    %v1118 = vpop.permute.xlu0 %1117
    %1119 = vrot.lane.b32.xlu0 %v217, 112
    %v1120 = vpop.permute.xlu0 %1119
    %1121 = vrot.lane.b32.xlu0 %v218, 112
    %v1122 = vpop.permute.xlu0 %1121
    %1123 = vrot.lane.b32.xlu0 %v219, 112
    %v1124 = vpop.permute.xlu0 %1123
    %1125 = vrot.lane.b32.xlu0 %v220, 112
    %v1126 = vpop.permute.xlu0 %1125
    %1127 = vrot.lane.b32.xlu0 %v221, 112
    %v1128 = vpop.permute.xlu0 %1127
    %1129 = vrot.lane.b32.xlu0 %v222, 112
    %v1130 = vpop.permute.xlu0 %1129
    %v1131 = vsel %vm262, %v1100, 0
    %v1133 = vsel %vm262, %v1102, 0
    %v1135 = vsel %vm262, %v1104, 0
    %v1137 = vsel %vm262, %v1106, 0
    %v1139 = vsel %vm262, %v1108, 0
    %v1141 = vsel %vm262, %v1110, 0
    %v1143 = vsel %vm262, %v1112, 0
    %v1145 = vsel %vm262, %v1114, 0
    %v1147 = vsel %vm262, %v1116, 0
    %v1149 = vsel %vm262, %v1118, 0
    %v1151 = vsel %vm262, %v1120, 0
    %v1153 = vsel %vm262, %v1122, 0
    %v1155 = vsel %vm262, %v1124, 0
    %v1157 = vsel %vm262, %v1126, 0
    %v1159 = vsel %vm262, %v1128, 0
    %v1161 = vsel %vm262, %v1130, 0
    %1163 = vmatprep.subr.mxu0 0.0
    %1164 = vmatpush1.xpose.msra.mxu0 %v1147
    %1165 = vmatprep.subr.mxu0 0.0
    %1166 = vmatpush1.xpose.msra.mxu0 %v1149
    %1167 = vmatprep.subr.mxu0 0.0
    %1168 = vmatpush1.xpose.msra.mxu0 %v1151
    %1169 = vmatprep.subr.mxu0 0.0
    %1170 = vmatpush1.xpose.msra.mxu0 %v1153
    %1171 = vmatprep.subr.mxu0 0.0
    %1172 = vmatpush1.xpose.msra.mxu0 %v1155
    %1173 = vmatprep.subr.mxu0 0.0
    %1174 = vmatpush1.xpose.msra.mxu0 %v1157
    %1175 = vmatprep.subr.mxu0 0.0
    %1176 = vmatpush1.xpose.msra.mxu0 %v1159
    %1177 = vmatprep.subr.mxu0 0.0
    %1178 = vmatpush1.xpose.msra.mxu0 %v1161
    %1179 = vmatprep.subr.mxu0 0.0
    %1180 = vmatpush1.xpose.msra.mxu0 0.0
    %1181 = vmatprep.subr.mxu0 0.0
    %1182 = vmatpush1.xpose.msra.mxu0 0.0
    %1183 = vmatprep.subr.mxu0 0.0
    %1184 = vmatpush1.xpose.msra.mxu0 0.0
    %1185 = vmatprep.subr.mxu0 0.0
    %1186 = vmatpush1.xpose.msra.mxu0 0.0
    %1187 = vmatprep.subr.mxu0 0.0
    %1188 = vmatpush1.xpose.msra.mxu0 0.0
    %1189 = vmatprep.subr.mxu0 0.0
    %1190 = vmatpush1.xpose.msra.mxu0 0.0
    %1191 = vmatprep.subr.mxu0 0.0
    %1192 = vmatpush1.xpose.msra.mxu0 0.0
    %1193 = vmatprep.subr.mxu0 0.0
    %1194 = vmatpush1.xpose.msra.mxu0 0.0
    %1195 = vmatprep.subr.mxu0 0.0
    %1196 = vmatpush1.xpose.msra.mxu0 0.0
    %1197 = vmatprep.subr.mxu0 0.0
    %1198 = vmatpush1.xpose.msra.mxu0 0.0
    %1199 = vmatprep.subr.mxu0 0.0
    %1200 = vmatpush1.xpose.msra.mxu0 0.0
    %1201 = vmatprep.subr.mxu0 0.0
    %1202 = vmatpush1.xpose.msra.mxu0 0.0
    %1203 = vmatprep.subr.mxu0 0.0
    %1204 = vmatpush1.xpose.msra.mxu0 0.0
    %1205 = vmatprep.subr.mxu0 0.0
    %1206 = vmatpush1.xpose.msra.mxu0 0.0
    %1207 = vmatprep.subr.mxu0 0.0
    %1208 = vmatpush1.xpose.msra.mxu0 0.0
    %1209 = vmatprep.subr.mxu0 0.0
    %1210 = vmatpush1.xpose.msra.mxu0 0.0
    %1211 = vmatprep.subr.mxu0 0.0
    %1212 = vmatpush1.xpose.msra.mxu0 0.0
    %1213 = vmatprep.subr.mxu0 0.0
    %1214 = vmatpush1.xpose.msra.mxu0 0.0
    %1215 = vmatprep.subr.mxu0 0.0
    %1216 = vmatpush1.xpose.msra.mxu0 0.0
    %1217 = vmatprep.subr.mxu0 0.0
    %1218 = vmatpush1.xpose.msra.mxu0 0.0
    %1219 = vmatprep.subr.mxu0 0.0
    %1220 = vmatpush1.xpose.msra.mxu0 0.0
    %1221 = vmatprep.subr.mxu0 0.0
    %1222 = vmatpush1.xpose.msra.mxu0 0.0
    %1223 = vmatprep.subr.mxu0 0.0
    %1224 = vmatpush1.xpose.msra.mxu0 0.0
    %1225 = vmatprep.subr.mxu0 0.0
    %1226 = vmatpush1.xpose.msra.mxu0 0.0
    %1227 = vmatprep.mubr.f32.mxu0 0.0
    %1228 = vmatmul.mubr.f32.gmra.mrb[0].mxu0 %v1131
    %v1229 = vpop.f32.mrb[0].mxu0
    %v1230 = vadd.f32 %v253, %v1229
    %v1231 = vpop.f32.mrb[0].mxu0
    %1232 = vmatprep.mubr.f32.mxu0 0.0
    %1233 = vmatmul.mubr.f32.gmra.mrb[0].mxu0 %v1133
    %v1234 = vpop.f32.mrb[0].mxu0
    %v1235 = vadd.f32 %v254, %v1234
    %v1236 = vpop.f32.mrb[0].mxu0
    %1237 = vmatprep.mubr.f32.mxu0 0.0
    %1238 = vmatmul.mubr.f32.gmra.mrb[0].mxu0 %v1135
    %v1239 = vpop.f32.mrb[0].mxu0
    %v1240 = vadd.f32 %v255, %v1239
    %v1241 = vpop.f32.mrb[0].mxu0
    %1242 = vmatprep.mubr.f32.mxu0 0.0
    %1243 = vmatmul.mubr.f32.gmra.mrb[0].mxu0 %v1137
    %v1244 = vpop.f32.mrb[0].mxu0
    %v1245 = vadd.f32 %v256, %v1244
    %v1246 = vpop.f32.mrb[0].mxu0
    %1247 = vmatprep.mubr.f32.mxu0 0.0
    %1248 = vmatmul.mubr.f32.gmra.mrb[0].mxu0 %v1139
    %v1249 = vpop.f32.mrb[0].mxu0
    %v1250 = vadd.f32 %v257, %v1249
    %v1251 = vpop.f32.mrb[0].mxu0
    %1252 = vmatprep.mubr.f32.mxu0 0.0
    %1253 = vmatmul.mubr.f32.gmra.mrb[0].mxu0 %v1141
    %v1254 = vpop.f32.mrb[0].mxu0
    %v1255 = vadd.f32 %v258, %v1254
    %v1256 = vpop.f32.mrb[0].mxu0
    %1257 = vmatprep.mubr.f32.mxu0 0.0
    %1258 = vmatmul.mubr.f32.gmra.mrb[0].mxu0 %v1143
    %v1259 = vpop.f32.mrb[0].mxu0
    %v1260 = vadd.f32 %v259, %v1259
    %v1261 = vpop.f32.mrb[0].mxu0
    %1262 = vmatprep.mubr.f32.mxu0 0.0
    %1263 = vmatmul.mubr.f32.gmra.mrb[0].mxu0 %v1145
    %v1264 = vpop.f32.mrb[0].mxu0
    %v1265 = vadd.f32 %v260, %v1264
    %v1266 = vpop.f32.mrb[0].mxu0
    %1267 = vdwg.mxu0
    %v1268 = vsel %vm416, %v1230, -inf
    %1269 = vmax.xlane.f32.xlu0 %v1268
    %v1270 = vpop.xlane.xlu0 %1269
    %v1271 = vsel %vm416, %v1235, -inf
    %1272 = vmax.xlane.f32.xlu0 %v1271
    %v1273 = vpop.xlane.xlu0 %1272
    %v1274 = vsel %vm416, %v1240, -inf
    %1275 = vmax.xlane.f32.xlu0 %v1274
    %v1276 = vpop.xlane.xlu0 %1275
    %v1277 = vsel %vm416, %v1245, -inf
    %1278 = vmax.xlane.f32.xlu0 %v1277
    %v1279 = vpop.xlane.xlu0 %1278
    %v1280 = vsel %vm416, %v1250, -inf
    %1281 = vmax.xlane.f32.xlu0 %v1280
    %v1282 = vpop.xlane.xlu0 %1281
    %v1283 = vsel %vm416, %v1255, -inf
    %1284 = vmax.xlane.f32.xlu0 %v1283
    %v1285 = vpop.xlane.xlu0 %1284
    %v1286 = vsel %vm416, %v1260, -inf
    %1287 = vmax.xlane.f32.xlu0 %v1286
    %v1288 = vpop.xlane.xlu0 %1287
    %v1289 = vsel %vm416, %v1265, -inf
    %1290 = vmax.xlane.f32.xlu0 %v1289
    %v1291 = vpop.xlane.xlu0 %1290
    %v1292 = vsub.f32 %v1230, %v1270
    %v1293 = vsub.f32 %v1235, %v1273
    %v1294 = vsub.f32 %v1240, %v1276
    %v1295 = vsub.f32 %v1245, %v1279
    %v1296 = vsub.f32 %v1250, %v1282
    %v1297 = vsub.f32 %v1255, %v1285
    %v1298 = vsub.f32 %v1260, %v1288
    %v1299 = vsub.f32 %v1265, %v1291
    %v1300 = vmul.f32 %v1292, 1.442695
    %v1301 = vpow.pop %v1300
    %v1302 = vmul.f32 %v1293, 1.442695
    %v1303 = vpow.pop %v1302
    %v1304 = vmul.f32 %v1294, 1.442695
    %v1305 = vpow.pop %v1304
    %v1306 = vmul.f32 %v1295, 1.442695
    %v1307 = vpow.pop %v1306
    %v1308 = vmul.f32 %v1296, 1.442695
    %v1309 = vpow.pop %v1308
    %v1310 = vmul.f32 %v1297, 1.442695
    %v1311 = vpow.pop %v1310
    %v1312 = vmul.f32 %v1298, 1.442695
    %v1313 = vpow.pop %v1312
    %v1314 = vmul.f32 %v1299, 1.442695
    %v1315 = vpow.pop %v1314
    %v1316 = vsel %vm416, %v1301, 0.0
    %1317 = vadd.xlane.f32.xlu0 %v1316
    %v1318 = vpop.xlane.xlu0 %1317
    %v1319 = vsel %vm416, %v1303, 0.0
    %1320 = vadd.xlane.f32.xlu0 %v1319
    %v1321 = vpop.xlane.xlu0 %1320
    %v1322 = vsel %vm416, %v1305, 0.0
    %1323 = vadd.xlane.f32.xlu0 %v1322
    %v1324 = vpop.xlane.xlu0 %1323
    %v1325 = vsel %vm416, %v1307, 0.0
    %1326 = vadd.xlane.f32.xlu0 %v1325
    %v1327 = vpop.xlane.xlu0 %1326
    %v1328 = vsel %vm416, %v1309, 0.0
    %1329 = vadd.xlane.f32.xlu0 %v1328
    %v1330 = vpop.xlane.xlu0 %1329
    %v1331 = vsel %vm416, %v1311, 0.0
    %1332 = vadd.xlane.f32.xlu0 %v1331
    %v1333 = vpop.xlane.xlu0 %1332
    %v1334 = vsel %vm416, %v1313, 0.0
    %1335 = vadd.xlane.f32.xlu0 %v1334
    %v1336 = vpop.xlane.xlu0 %1335
    %v1337 = vsel %vm416, %v1315, 0.0
    %1338 = vadd.xlane.f32.xlu0 %v1337
    %v1339 = vpop.xlane.xlu0 %1338
    %v1340 = vrcp.pop %v1318
    %v1341 = vmul.f32 %v1301, %v1340
    %v1342 = vrcp.pop %v1321
    %v1343 = vmul.f32 %v1303, %v1342
    %v1344 = vrcp.pop %v1324
    %v1345 = vmul.f32 %v1305, %v1344
    %v1346 = vrcp.pop %v1327
    %v1347 = vmul.f32 %v1307, %v1346
    %v1348 = vrcp.pop %v1330
    %v1349 = vmul.f32 %v1309, %v1348
    %v1350 = vrcp.pop %v1333
    %v1351 = vmul.f32 %v1311, %v1350
    %v1352 = vrcp.pop %v1336
    %v1353 = vmul.f32 %v1313, %v1352
    %v1354 = vrcp.pop %v1339
    %v1355 = vmul.f32 %v1315, %v1354
    %v1356 = vadd.f32 %v916, %v1341
    %v1357 = vadd.f32 %v917, %v1343
    %v1358 = vadd.f32 %v918, %v1345
    %v1359 = vadd.f32 %v919, %v1347
    %v1360 = vadd.f32 %v920, %v1349
    %v1361 = vadd.f32 %v921, %v1351
    %v1362 = vadd.f32 %v922, %v1353
    %v1363 = vadd.f32 %v923, %v1355
    %1364 = vmatprep.subr.mxu0 0.0
    %1365 = vmatpush1.msra.mxu0 %v1341
    %1366 = vmatprep.subr.mxu0 0.0
    %1367 = vmatpush1.msra.mxu0 %v1343
    %1368 = vmatprep.subr.mxu0 0.0
    %1369 = vmatpush1.msra.mxu0 %v1345
    %1370 = vmatprep.subr.mxu0 0.0
    %1371 = vmatpush1.msra.mxu0 %v1347
    %1372 = vmatprep.subr.mxu0 0.0
    %1373 = vmatpush1.msra.mxu0 %v1349
    %1374 = vmatprep.subr.mxu0 0.0
    %1375 = vmatpush1.msra.mxu0 %v1351
    %1376 = vmatprep.subr.mxu0 0.0
    %1377 = vmatpush1.msra.mxu0 %v1353
    %1378 = vmatprep.subr.mxu0 0.0
    %1379 = vmatpush1.msra.mxu0 %v1355
    %1380 = vmatprep.subr.mxu0 0.0
    %1381 = vmatpush1.msra.mxu0 0.0
    %1382 = vmatprep.subr.mxu0 0.0
    %1383 = vmatpush1.msra.mxu0 0.0
    %1384 = vmatprep.subr.mxu0 0.0
    %1385 = vmatpush1.msra.mxu0 0.0
    %1386 = vmatprep.subr.mxu0 0.0
    %1387 = vmatpush1.msra.mxu0 0.0
    %1388 = vmatprep.subr.mxu0 0.0
    %1389 = vmatpush1.msra.mxu0 0.0
    %1390 = vmatprep.subr.mxu0 0.0
    %1391 = vmatpush1.msra.mxu0 0.0
    %1392 = vmatprep.subr.mxu0 0.0
    %1393 = vmatpush1.msra.mxu0 0.0
    %1394 = vmatprep.subr.mxu0 0.0
    %1395 = vmatpush1.msra.mxu0 0.0
    %1396 = vmatprep.subr.mxu0 0.0
    %1397 = vmatpush1.msra.mxu0 0.0
    %1398 = vmatprep.subr.mxu0 0.0
    %1399 = vmatpush1.msra.mxu0 0.0
    %1400 = vmatprep.subr.mxu0 0.0
    %1401 = vmatpush1.msra.mxu0 0.0
    %1402 = vmatprep.subr.mxu0 0.0
    %1403 = vmatpush1.msra.mxu0 0.0
    %1404 = vmatprep.subr.mxu0 0.0
    %1405 = vmatpush1.msra.mxu0 0.0
    %1406 = vmatprep.subr.mxu0 0.0
    %1407 = vmatpush1.msra.mxu0 0.0
    %1408 = vmatprep.subr.mxu0 0.0
    %1409 = vmatpush1.msra.mxu0 0.0
    %1410 = vmatprep.subr.mxu0 0.0
    %1411 = vmatpush1.msra.mxu0 0.0
    %1412 = vmatprep.subr.mxu0 0.0
    %1413 = vmatpush1.msra.mxu0 0.0
    %1414 = vmatprep.subr.mxu0 0.0
    %1415 = vmatpush1.msra.mxu0 0.0
    %1416 = vmatprep.subr.mxu0 0.0
    %1417 = vmatpush1.msra.mxu0 0.0
    %1418 = vmatprep.subr.mxu0 0.0
    %1419 = vmatpush1.msra.mxu0 0.0
    %1420 = vmatprep.subr.mxu0 0.0
    %1421 = vmatpush1.msra.mxu0 0.0
    %1422 = vmatprep.subr.mxu0 0.0
    %1423 = vmatpush1.msra.mxu0 0.0
    %1424 = vmatprep.subr.mxu0 0.0
    %1425 = vmatpush1.msra.mxu0 0.0
    %1426 = vmatprep.subr.mxu0 0.0
    %1427 = vmatpush1.msra.mxu0 0.0
    %1428 = vmatprep.mubr.f32.mxu0 0.0
    %1429 = vmatmul.mubr.f32.gmra.mrb[0].mxu0 %v514
    %v1430 = vpop.f32.mrb[0].mxu0
    %v1431 = vadd.f32 0.0, %v1430
    %v1432 = vpop.f32.mrb[0].mxu0
    %1433 = vdwg.mxu0
    %1434 = vrot.lane.b32.xlu0 %v245, 112
    %v1435 = vpop.permute.xlu0 %1434
    %1436 = vrot.lane.b32.xlu0 %v246, 112
    %v1437 = vpop.permute.xlu0 %1436
    %1438 = vrot.lane.b32.xlu0 %v247, 112
    %v1439 = vpop.permute.xlu0 %1438
    %1440 = vrot.lane.b32.xlu0 %v248, 112
    %v1441 = vpop.permute.xlu0 %1440
    %1442 = vrot.lane.b32.xlu0 %v249, 112
    %v1443 = vpop.permute.xlu0 %1442
    %1444 = vrot.lane.b32.xlu0 %v250, 112
    %v1445 = vpop.permute.xlu0 %1444
    %1446 = vrot.lane.b32.xlu0 %v251, 112
    %v1447 = vpop.permute.xlu0 %1446
    %1448 = vrot.lane.b32.xlu0 %v252, 112
    %v1449 = vpop.permute.xlu0 %1448
    %v1459 = vsel %vm416, %v1431, 0
    %1461 = vmatprep.subr.mxu0 0.0
    %1462 = vmatpush1.msra.mxu0 %v1435
    %1463 = vmatprep.subr.mxu0 0.0
    %1464 = vmatpush1.msra.mxu0 %v1437
    %1465 = vmatprep.subr.mxu0 0.0
    %1466 = vmatpush1.msra.mxu0 %v1439
    %1467 = vmatprep.subr.mxu0 0.0
    %1468 = vmatpush1.msra.mxu0 %v1441
    %1469 = vmatprep.subr.mxu0 0.0
    %1470 = vmatpush1.msra.mxu0 %v1443
    %1471 = vmatprep.subr.mxu0 0.0
    %1472 = vmatpush1.msra.mxu0 %v1445
    %1473 = vmatprep.subr.mxu0 0.0
    %1474 = vmatpush1.msra.mxu0 %v1447
    %1475 = vmatprep.subr.mxu0 0.0
    %1476 = vmatpush1.msra.mxu0 %v1449
    %1477 = vmatprep.subr.mxu0 0.0
    %1478 = vmatpush1.msra.mxu0 0.0
    %1479 = vmatprep.subr.mxu0 0.0
    %1480 = vmatpush1.msra.mxu0 0.0
    %1481 = vmatprep.subr.mxu0 0.0
    %1482 = vmatpush1.msra.mxu0 0.0
    %1483 = vmatprep.subr.mxu0 0.0
    %1484 = vmatpush1.msra.mxu0 0.0
    %1485 = vmatprep.subr.mxu0 0.0
    %1486 = vmatpush1.msra.mxu0 0.0
    %1487 = vmatprep.subr.mxu0 0.0
    %1488 = vmatpush1.msra.mxu0 0.0
    %1489 = vmatprep.subr.mxu0 0.0
    %1490 = vmatpush1.msra.mxu0 0.0
    %1491 = vmatprep.subr.mxu0 0.0
    %1492 = vmatpush1.msra.mxu0 0.0
    %1493 = vmatprep.subr.mxu0 0.0
    %1494 = vmatpush1.msra.mxu0 0.0
    %1495 = vmatprep.subr.mxu0 0.0
    %1496 = vmatpush1.msra.mxu0 0.0
    %1497 = vmatprep.subr.mxu0 0.0
    %1498 = vmatpush1.msra.mxu0 0.0
    %1499 = vmatprep.subr.mxu0 0.0
    %1500 = vmatpush1.msra.mxu0 0.0
    %1501 = vmatprep.subr.mxu0 0.0
    %1502 = vmatpush1.msra.mxu0 0.0
    %1503 = vmatprep.subr.mxu0 0.0
    %1504 = vmatpush1.msra.mxu0 0.0
    %1505 = vmatprep.subr.mxu0 0.0
    %1506 = vmatpush1.msra.mxu0 0.0
    %1507 = vmatprep.subr.mxu0 0.0
    %1508 = vmatpush1.msra.mxu0 0.0
    %1509 = vmatprep.subr.mxu0 0.0
    %1510 = vmatpush1.msra.mxu0 0.0
    %1511 = vmatprep.subr.mxu0 0.0
    %1512 = vmatpush1.msra.mxu0 0.0
    %1513 = vmatprep.subr.mxu0 0.0
    %1514 = vmatpush1.msra.mxu0 0.0
    %1515 = vmatprep.subr.mxu0 0.0
    %1516 = vmatpush1.msra.mxu0 0.0
    %1517 = vmatprep.subr.mxu0 0.0
    %1518 = vmatpush1.msra.mxu0 0.0
    %1519 = vmatprep.subr.mxu0 0.0
    %1520 = vmatpush1.msra.mxu0 0.0
    %1521 = vmatprep.subr.mxu0 0.0
    %1522 = vmatpush1.msra.mxu0 0.0
    %1523 = vmatprep.subr.mxu0 0.0
    %1524 = vmatpush1.msra.mxu0 0.0
    %1525 = vmatprep.mubr.f32.mxu0 0.0
    %1526 = vmatmul.mubr.f32.gmra.mrb[0].mxu0 %v1459
    %v1527 = vpop.f32.mrb[0].mxu0
    %v1528 = vadd.f32 0.0, %v1527
    %v1529 = vpop.f32.mrb[0].mxu0
    %1530 = vdwg.mxu0
    %1531 = vrot.lane.b32.xlu0 %v185, 104
    %v1532 = vpop.permute.xlu0 %1531
    %1533 = vrot.lane.b32.xlu0 %v186, 104
    %v1534 = vpop.permute.xlu0 %1533
    %1535 = vrot.lane.b32.xlu0 %v187, 104
    %v1536 = vpop.permute.xlu0 %1535
    %1537 = vrot.lane.b32.xlu0 %v188, 104
    %v1538 = vpop.permute.xlu0 %1537
    %1539 = vrot.lane.b32.xlu0 %v189, 104
    %v1540 = vpop.permute.xlu0 %1539
    %1541 = vrot.lane.b32.xlu0 %v190, 104
    %v1542 = vpop.permute.xlu0 %1541
    %1543 = vrot.lane.b32.xlu0 %v191, 104
    %v1544 = vpop.permute.xlu0 %1543
    %1545 = vrot.lane.b32.xlu0 %v192, 104
    %v1546 = vpop.permute.xlu0 %1545
    %1547 = vrot.lane.b32.xlu0 %v215, 104
    %v1548 = vpop.permute.xlu0 %1547
    %1549 = vrot.lane.b32.xlu0 %v216, 104
    %v1550 = vpop.permute.xlu0 %1549
    %1551 = vrot.lane.b32.xlu0 %v217, 104
    %v1552 = vpop.permute.xlu0 %1551
    %1553 = vrot.lane.b32.xlu0 %v218, 104
    %v1554 = vpop.permute.xlu0 %1553
    %1555 = vrot.lane.b32.xlu0 %v219, 104
    %v1556 = vpop.permute.xlu0 %1555
    %1557 = vrot.lane.b32.xlu0 %v220, 104
    %v1558 = vpop.permute.xlu0 %1557
    %1559 = vrot.lane.b32.xlu0 %v221, 104
    %v1560 = vpop.permute.xlu0 %1559
    %1561 = vrot.lane.b32.xlu0 %v222, 104
    %v1562 = vpop.permute.xlu0 %1561
    %v1563 = vsel %vm262, %v1532, 0
    %v1565 = vsel %vm262, %v1534, 0
    %v1567 = vsel %vm262, %v1536, 0
    %v1569 = vsel %vm262, %v1538, 0
    %v1571 = vsel %vm262, %v1540, 0
    %v1573 = vsel %vm262, %v1542, 0
    %v1575 = vsel %vm262, %v1544, 0
    %v1577 = vsel %vm262, %v1546, 0
    %v1579 = vsel %vm262, %v1548, 0
    %v1581 = vsel %vm262, %v1550, 0
    %v1583 = vsel %vm262, %v1552, 0
    %v1585 = vsel %vm262, %v1554, 0
    %v1587 = vsel %vm262, %v1556, 0
    %v1589 = vsel %vm262, %v1558, 0
    %v1591 = vsel %vm262, %v1560, 0
    %v1593 = vsel %vm262, %v1562, 0
    %1595 = vmatprep.subr.mxu0 0.0
    %1596 = vmatpush1.xpose.msra.mxu0 %v1579
    %1597 = vmatprep.subr.mxu0 0.0
    %1598 = vmatpush1.xpose.msra.mxu0 %v1581
    %1599 = vmatprep.subr.mxu0 0.0
    %1600 = vmatpush1.xpose.msra.mxu0 %v1583
    %1601 = vmatprep.subr.mxu0 0.0
    %1602 = vmatpush1.xpose.msra.mxu0 %v1585
    %1603 = vmatprep.subr.mxu0 0.0
    %1604 = vmatpush1.xpose.msra.mxu0 %v1587
    %1605 = vmatprep.subr.mxu0 0.0
    %1606 = vmatpush1.xpose.msra.mxu0 %v1589
    %1607 = vmatprep.subr.mxu0 0.0
    %1608 = vmatpush1.xpose.msra.mxu0 %v1591
    %1609 = vmatprep.subr.mxu0 0.0
    %1610 = vmatpush1.xpose.msra.mxu0 %v1593
    %1611 = vmatprep.subr.mxu0 0.0
    %1612 = vmatpush1.xpose.msra.mxu0 0.0
    %1613 = vmatprep.subr.mxu0 0.0
    %1614 = vmatpush1.xpose.msra.mxu0 0.0
    %1615 = vmatprep.subr.mxu0 0.0
    %1616 = vmatpush1.xpose.msra.mxu0 0.0
    %1617 = vmatprep.subr.mxu0 0.0
    %1618 = vmatpush1.xpose.msra.mxu0 0.0
    %1619 = vmatprep.subr.mxu0 0.0
    %1620 = vmatpush1.xpose.msra.mxu0 0.0
    %1621 = vmatprep.subr.mxu0 0.0
    %1622 = vmatpush1.xpose.msra.mxu0 0.0
    %1623 = vmatprep.subr.mxu0 0.0
    %1624 = vmatpush1.xpose.msra.mxu0 0.0
    %1625 = vmatprep.subr.mxu0 0.0
    %1626 = vmatpush1.xpose.msra.mxu0 0.0
    %1627 = vmatprep.subr.mxu0 0.0
    %1628 = vmatpush1.xpose.msra.mxu0 0.0
    %1629 = vmatprep.subr.mxu0 0.0
    %1630 = vmatpush1.xpose.msra.mxu0 0.0
    %1631 = vmatprep.subr.mxu0 0.0
    %1632 = vmatpush1.xpose.msra.mxu0 0.0
    %1633 = vmatprep.subr.mxu0 0.0
    %1634 = vmatpush1.xpose.msra.mxu0 0.0
    %1635 = vmatprep.subr.mxu0 0.0
    %1636 = vmatpush1.xpose.msra.mxu0 0.0
    %1637 = vmatprep.subr.mxu0 0.0
    %1638 = vmatpush1.xpose.msra.mxu0 0.0
    %1639 = vmatprep.subr.mxu0 0.0
    %1640 = vmatpush1.xpose.msra.mxu0 0.0
    %1641 = vmatprep.subr.mxu0 0.0
    %1642 = vmatpush1.xpose.msra.mxu0 0.0
    %1643 = vmatprep.subr.mxu0 0.0
    %1644 = vmatpush1.xpose.msra.mxu0 0.0
    %1645 = vmatprep.subr.mxu0 0.0
    %1646 = vmatpush1.xpose.msra.mxu0 0.0
    %1647 = vmatprep.subr.mxu0 0.0
    %1648 = vmatpush1.xpose.msra.mxu0 0.0
    %1649 = vmatprep.subr.mxu0 0.0
    %1650 = vmatpush1.xpose.msra.mxu0 0.0
    %1651 = vmatprep.subr.mxu0 0.0
    %1652 = vmatpush1.xpose.msra.mxu0 0.0
    %1653 = vmatprep.subr.mxu0 0.0
    %1654 = vmatpush1.xpose.msra.mxu0 0.0
    %1655 = vmatprep.subr.mxu0 0.0
    %1656 = vmatpush1.xpose.msra.mxu0 0.0
    %1657 = vmatprep.subr.mxu0 0.0
    %1658 = vmatpush1.xpose.msra.mxu0 0.0
    %1659 = vmatprep.mubr.f32.mxu0 0.0
    %1660 = vmatmul.mubr.f32.gmra.mrb[0].mxu0 %v1563
    %v1661 = vpop.f32.mrb[0].mxu0
    %v1662 = vadd.f32 %v253, %v1661
    %v1663 = vpop.f32.mrb[0].mxu0
    %1664 = vmatprep.mubr.f32.mxu0 0.0
    %1665 = vmatmul.mubr.f32.gmra.mrb[0].mxu0 %v1565
    %v1666 = vpop.f32.mrb[0].mxu0
    %v1667 = vadd.f32 %v254, %v1666
    %v1668 = vpop.f32.mrb[0].mxu0
    %1669 = vmatprep.mubr.f32.mxu0 0.0
    %1670 = vmatmul.mubr.f32.gmra.mrb[0].mxu0 %v1567
    %v1671 = vpop.f32.mrb[0].mxu0
    %v1672 = vadd.f32 %v255, %v1671
    %v1673 = vpop.f32.mrb[0].mxu0
    %1674 = vmatprep.mubr.f32.mxu0 0.0
    %1675 = vmatmul.mubr.f32.gmra.mrb[0].mxu0 %v1569
    %v1676 = vpop.f32.mrb[0].mxu0
    %v1677 = vadd.f32 %v256, %v1676
    %v1678 = vpop.f32.mrb[0].mxu0
    %1679 = vmatprep.mubr.f32.mxu0 0.0
    %1680 = vmatmul.mubr.f32.gmra.mrb[0].mxu0 %v1571
    %v1681 = vpop.f32.mrb[0].mxu0
    %v1682 = vadd.f32 %v257, %v1681
    %v1683 = vpop.f32.mrb[0].mxu0
    %1684 = vmatprep.mubr.f32.mxu0 0.0
    %1685 = vmatmul.mubr.f32.gmra.mrb[0].mxu0 %v1573
    %v1686 = vpop.f32.mrb[0].mxu0
    %v1687 = vadd.f32 %v258, %v1686
    %v1688 = vpop.f32.mrb[0].mxu0
    %1689 = vmatprep.mubr.f32.mxu0 0.0
    %1690 = vmatmul.mubr.f32.gmra.mrb[0].mxu0 %v1575
    %v1691 = vpop.f32.mrb[0].mxu0
    %v1692 = vadd.f32 %v259, %v1691
    %v1693 = vpop.f32.mrb[0].mxu0
    %1694 = vmatprep.mubr.f32.mxu0 0.0
    %1695 = vmatmul.mubr.f32.gmra.mrb[0].mxu0 %v1577
    %v1696 = vpop.f32.mrb[0].mxu0
    %v1697 = vadd.f32 %v260, %v1696
    %v1698 = vpop.f32.mrb[0].mxu0
    %1699 = vdwg.mxu0
    %v1700 = vsel %vm416, %v1662, -inf
    %1701 = vmax.xlane.f32.xlu0 %v1700
    %v1702 = vpop.xlane.xlu0 %1701
    %v1703 = vsel %vm416, %v1667, -inf
    %1704 = vmax.xlane.f32.xlu0 %v1703
    %v1705 = vpop.xlane.xlu0 %1704
    %v1706 = vsel %vm416, %v1672, -inf
    %1707 = vmax.xlane.f32.xlu0 %v1706
    %v1708 = vpop.xlane.xlu0 %1707
    %v1709 = vsel %vm416, %v1677, -inf
    %1710 = vmax.xlane.f32.xlu0 %v1709
    %v1711 = vpop.xlane.xlu0 %1710
    %v1712 = vsel %vm416, %v1682, -inf
    %1713 = vmax.xlane.f32.xlu0 %v1712
    %v1714 = vpop.xlane.xlu0 %1713
    %v1715 = vsel %vm416, %v1687, -inf
    %1716 = vmax.xlane.f32.xlu0 %v1715
    %v1717 = vpop.xlane.xlu0 %1716
    %v1718 = vsel %vm416, %v1692, -inf
    %1719 = vmax.xlane.f32.xlu0 %v1718
    %v1720 = vpop.xlane.xlu0 %1719
    %v1721 = vsel %vm416, %v1697, -inf
    %1722 = vmax.xlane.f32.xlu0 %v1721
    %v1723 = vpop.xlane.xlu0 %1722
    %v1724 = vsub.f32 %v1662, %v1702
    %v1725 = vsub.f32 %v1667, %v1705
    %v1726 = vsub.f32 %v1672, %v1708
    %v1727 = vsub.f32 %v1677, %v1711
    %v1728 = vsub.f32 %v1682, %v1714
    %v1729 = vsub.f32 %v1687, %v1717
    %v1730 = vsub.f32 %v1692, %v1720
    %v1731 = vsub.f32 %v1697, %v1723
    %v1732 = vmul.f32 %v1724, 1.442695
    %v1733 = vpow.pop %v1732
    %v1734 = vmul.f32 %v1725, 1.442695
    %v1735 = vpow.pop %v1734
    %v1736 = vmul.f32 %v1726, 1.442695
    %v1737 = vpow.pop %v1736
    %v1738 = vmul.f32 %v1727, 1.442695
    %v1739 = vpow.pop %v1738
    %v1740 = vmul.f32 %v1728, 1.442695
    %v1741 = vpow.pop %v1740
    %v1742 = vmul.f32 %v1729, 1.442695
    %v1743 = vpow.pop %v1742
    %v1744 = vmul.f32 %v1730, 1.442695
    %v1745 = vpow.pop %v1744
    %v1746 = vmul.f32 %v1731, 1.442695
    %v1747 = vpow.pop %v1746
    %v1748 = vsel %vm416, %v1733, 0.0
    %1749 = vadd.xlane.f32.xlu0 %v1748
    %v1750 = vpop.xlane.xlu0 %1749
    %v1751 = vsel %vm416, %v1735, 0.0
    %1752 = vadd.xlane.f32.xlu0 %v1751
    %v1753 = vpop.xlane.xlu0 %1752
    %v1754 = vsel %vm416, %v1737, 0.0
    %1755 = vadd.xlane.f32.xlu0 %v1754
    %v1756 = vpop.xlane.xlu0 %1755
    %v1757 = vsel %vm416, %v1739, 0.0
    %1758 = vadd.xlane.f32.xlu0 %v1757
    %v1759 = vpop.xlane.xlu0 %1758
    %v1760 = vsel %vm416, %v1741, 0.0
    %1761 = vadd.xlane.f32.xlu0 %v1760
    %v1762 = vpop.xlane.xlu0 %1761
    %v1763 = vsel %vm416, %v1743, 0.0
    %1764 = vadd.xlane.f32.xlu0 %v1763
    %v1765 = vpop.xlane.xlu0 %1764
    %v1766 = vsel %vm416, %v1745, 0.0
    %1767 = vadd.xlane.f32.xlu0 %v1766
    %v1768 = vpop.xlane.xlu0 %1767
    %v1769 = vsel %vm416, %v1747, 0.0
    %1770 = vadd.xlane.f32.xlu0 %v1769
    %v1771 = vpop.xlane.xlu0 %1770
    %v1772 = vrcp.pop %v1750
    %v1773 = vmul.f32 %v1733, %v1772
    %v1774 = vrcp.pop %v1753
    %v1775 = vmul.f32 %v1735, %v1774
    %v1776 = vrcp.pop %v1756
    %v1777 = vmul.f32 %v1737, %v1776
    %v1778 = vrcp.pop %v1759
    %v1779 = vmul.f32 %v1739, %v1778
    %v1780 = vrcp.pop %v1762
    %v1781 = vmul.f32 %v1741, %v1780
    %v1782 = vrcp.pop %v1765
    %v1783 = vmul.f32 %v1743, %v1782
    %v1784 = vrcp.pop %v1768
    %v1785 = vmul.f32 %v1745, %v1784
    %v1786 = vrcp.pop %v1771
    %v1787 = vmul.f32 %v1747, %v1786
    %v1788 = vadd.f32 %v1356, %v1773
    %v1789 = vadd.f32 %v1357, %v1775
    %v1790 = vadd.f32 %v1358, %v1777
    %v1791 = vadd.f32 %v1359, %v1779
    %v1792 = vadd.f32 %v1360, %v1781
    %v1793 = vadd.f32 %v1361, %v1783
    %v1794 = vadd.f32 %v1362, %v1785
    %v1795 = vadd.f32 %v1363, %v1787
    %1796 = vmatprep.subr.mxu0 0.0
    %1797 = vmatpush1.msra.mxu0 %v1773
    %1798 = vmatprep.subr.mxu0 0.0
    %1799 = vmatpush1.msra.mxu0 %v1775
    %1800 = vmatprep.subr.mxu0 0.0
    %1801 = vmatpush1.msra.mxu0 %v1777
    %1802 = vmatprep.subr.mxu0 0.0
    %1803 = vmatpush1.msra.mxu0 %v1779
    %1804 = vmatprep.subr.mxu0 0.0
    %1805 = vmatpush1.msra.mxu0 %v1781
    %1806 = vmatprep.subr.mxu0 0.0
    %1807 = vmatpush1.msra.mxu0 %v1783
    %1808 = vmatprep.subr.mxu0 0.0
    %1809 = vmatpush1.msra.mxu0 %v1785
    %1810 = vmatprep.subr.mxu0 0.0
    %1811 = vmatpush1.msra.mxu0 %v1787
    %1812 = vmatprep.subr.mxu0 0.0
    %1813 = vmatpush1.msra.mxu0 0.0
    %1814 = vmatprep.subr.mxu0 0.0
    %1815 = vmatpush1.msra.mxu0 0.0
    %1816 = vmatprep.subr.mxu0 0.0
    %1817 = vmatpush1.msra.mxu0 0.0
    %1818 = vmatprep.subr.mxu0 0.0
    %1819 = vmatpush1.msra.mxu0 0.0
    %1820 = vmatprep.subr.mxu0 0.0
    %1821 = vmatpush1.msra.mxu0 0.0
    %1822 = vmatprep.subr.mxu0 0.0
    %1823 = vmatpush1.msra.mxu0 0.0
    %1824 = vmatprep.subr.mxu0 0.0
    %1825 = vmatpush1.msra.mxu0 0.0
    %1826 = vmatprep.subr.mxu0 0.0
    %1827 = vmatpush1.msra.mxu0 0.0
    %1828 = vmatprep.subr.mxu0 0.0
    %1829 = vmatpush1.msra.mxu0 0.0
    %1830 = vmatprep.subr.mxu0 0.0
    %1831 = vmatpush1.msra.mxu0 0.0
    %1832 = vmatprep.subr.mxu0 0.0
    %1833 = vmatpush1.msra.mxu0 0.0
    %1834 = vmatprep.subr.mxu0 0.0
    %1835 = vmatpush1.msra.mxu0 0.0
    %1836 = vmatprep.subr.mxu0 0.0
    %1837 = vmatpush1.msra.mxu0 0.0
    %1838 = vmatprep.subr.mxu0 0.0
    %1839 = vmatpush1.msra.mxu0 0.0
    %1840 = vmatprep.subr.mxu0 0.0
    %1841 = vmatpush1.msra.mxu0 0.0
    %1842 = vmatprep.subr.mxu0 0.0
    %1843 = vmatpush1.msra.mxu0 0.0
    %1844 = vmatprep.subr.mxu0 0.0
    %1845 = vmatpush1.msra.mxu0 0.0
    %1846 = vmatprep.subr.mxu0 0.0
    %1847 = vmatpush1.msra.mxu0 0.0
    %1848 = vmatprep.subr.mxu0 0.0
    %1849 = vmatpush1.msra.mxu0 0.0
    %1850 = vmatprep.subr.mxu0 0.0
    %1851 = vmatpush1.msra.mxu0 0.0
    %1852 = vmatprep.subr.mxu0 0.0
    %1853 = vmatpush1.msra.mxu0 0.0
    %1854 = vmatprep.subr.mxu0 0.0
    %1855 = vmatpush1.msra.mxu0 0.0
    %1856 = vmatprep.subr.mxu0 0.0
    %1857 = vmatpush1.msra.mxu0 0.0
    %1858 = vmatprep.subr.mxu0 0.0
    %1859 = vmatpush1.msra.mxu0 0.0
    %1860 = vmatprep.mubr.f32.mxu0 0.0
    %1861 = vmatmul.mubr.f32.gmra.mrb[0].mxu0 %v514
    %v1862 = vpop.f32.mrb[0].mxu0
    %v1863 = vadd.f32 0.0, %v1862
    %v1864 = vpop.f32.mrb[0].mxu0
    %1865 = vdwg.mxu0
    %1866 = vrot.lane.b32.xlu0 %v245, 104
    %v1867 = vpop.permute.xlu0 %1866
    %1868 = vrot.lane.b32.xlu0 %v246, 104
    %v1869 = vpop.permute.xlu0 %1868
    %1870 = vrot.lane.b32.xlu0 %v247, 104
    %v1871 = vpop.permute.xlu0 %1870
    %1872 = vrot.lane.b32.xlu0 %v248, 104
    %v1873 = vpop.permute.xlu0 %1872
    %1874 = vrot.lane.b32.xlu0 %v249, 104
    %v1875 = vpop.permute.xlu0 %1874
    %1876 = vrot.lane.b32.xlu0 %v250, 104
    %v1877 = vpop.permute.xlu0 %1876
    %1878 = vrot.lane.b32.xlu0 %v251, 104
    %v1879 = vpop.permute.xlu0 %1878
    %1880 = vrot.lane.b32.xlu0 %v252, 104
    %v1881 = vpop.permute.xlu0 %1880
    %v1891 = vsel %vm416, %v1863, 0
    %1893 = vmatprep.subr.mxu0 0.0
    %1894 = vmatpush1.msra.mxu0 %v1867
    %1895 = vmatprep.subr.mxu0 0.0
    %1896 = vmatpush1.msra.mxu0 %v1869
    %1897 = vmatprep.subr.mxu0 0.0
    %1898 = vmatpush1.msra.mxu0 %v1871
    %1899 = vmatprep.subr.mxu0 0.0
    %1900 = vmatpush1.msra.mxu0 %v1873
    %1901 = vmatprep.subr.mxu0 0.0
    %1902 = vmatpush1.msra.mxu0 %v1875
    %1903 = vmatprep.subr.mxu0 0.0
    %1904 = vmatpush1.msra.mxu0 %v1877
    %1905 = vmatprep.subr.mxu0 0.0
    %1906 = vmatpush1.msra.mxu0 %v1879
    %1907 = vmatprep.subr.mxu0 0.0
    %1908 = vmatpush1.msra.mxu0 %v1881
    %1909 = vmatprep.subr.mxu0 0.0
    %1910 = vmatpush1.msra.mxu0 0.0
    %1911 = vmatprep.subr.mxu0 0.0
    %1912 = vmatpush1.msra.mxu0 0.0
    %1913 = vmatprep.subr.mxu0 0.0
    %1914 = vmatpush1.msra.mxu0 0.0
    %1915 = vmatprep.subr.mxu0 0.0
    %1916 = vmatpush1.msra.mxu0 0.0
    %1917 = vmatprep.subr.mxu0 0.0
    %1918 = vmatpush1.msra.mxu0 0.0
    %1919 = vmatprep.subr.mxu0 0.0
    %1920 = vmatpush1.msra.mxu0 0.0
    %1921 = vmatprep.subr.mxu0 0.0
    %1922 = vmatpush1.msra.mxu0 0.0
    %1923 = vmatprep.subr.mxu0 0.0
    %1924 = vmatpush1.msra.mxu0 0.0
    %1925 = vmatprep.subr.mxu0 0.0
    %1926 = vmatpush1.msra.mxu0 0.0
    %1927 = vmatprep.subr.mxu0 0.0
    %1928 = vmatpush1.msra.mxu0 0.0
    %1929 = vmatprep.subr.mxu0 0.0
    %1930 = vmatpush1.msra.mxu0 0.0
    %1931 = vmatprep.subr.mxu0 0.0
    %1932 = vmatpush1.msra.mxu0 0.0
    %1933 = vmatprep.subr.mxu0 0.0
    %1934 = vmatpush1.msra.mxu0 0.0
    %1935 = vmatprep.subr.mxu0 0.0
    %1936 = vmatpush1.msra.mxu0 0.0
    %1937 = vmatprep.subr.mxu0 0.0
    %1938 = vmatpush1.msra.mxu0 0.0
    %1939 = vmatprep.subr.mxu0 0.0
    %1940 = vmatpush1.msra.mxu0 0.0
    %1941 = vmatprep.subr.mxu0 0.0
    %1942 = vmatpush1.msra.mxu0 0.0
    %1943 = vmatprep.subr.mxu0 0.0
    %1944 = vmatpush1.msra.mxu0 0.0
    %1945 = vmatprep.subr.mxu0 0.0
    %1946 = vmatpush1.msra.mxu0 0.0
    %1947 = vmatprep.subr.mxu0 0.0
    %1948 = vmatpush1.msra.mxu0 0.0
    %1949 = vmatprep.subr.mxu0 0.0
    %1950 = vmatpush1.msra.mxu0 0.0
    %1951 = vmatprep.subr.mxu0 0.0
    %1952 = vmatpush1.msra.mxu0 0.0
    %1953 = vmatprep.subr.mxu0 0.0
    %1954 = vmatpush1.msra.mxu0 0.0
    %1955 = vmatprep.subr.mxu0 0.0
    %1956 = vmatpush1.msra.mxu0 0.0
    %1957 = vmatprep.mubr.f32.mxu0 0.0
    %1958 = vmatmul.mubr.f32.gmra.mrb[0].mxu0 %v1891
    %v1959 = vpop.f32.mrb[0].mxu0
    %v1960 = vadd.f32 0.0, %v1959
    %v1961 = vpop.f32.mrb[0].mxu0
    %1962 = vdwg.mxu0
    %1964 = vrot.lane.b32.xlu0 %v1096, 8
    %v1965 = vpop.permute.xlu0 %1964
    %1968 = vrot.lane.b32.xlu0 %v1528, 16
    %v1969 = vpop.permute.xlu0 %1968
    %1972 = vrot.lane.b32.xlu0 %v1960, 24
    %v1973 = vpop.permute.xlu0 %1972
    %v1975 = vsel %vm262, %v656, %v1965
    %vm1976 = vcmask 130048
    %v1977 = vsel %vm1976, %v1975, %v1969
    %vm1978 = vcmask 195584
    %v1979 = vsel %vm1978, %v1977, %v1973
    %v1980 = vld [vmem:[%s9] sm:$0xff]
    %v1981 = vld [vmem:[%s9 + $0x8] sm:$0xff]
    %v1982 = vld [vmem:[%s9 + $0x10] sm:$0xff]
    %v1983 = vld [vmem:[%s9 + $0x18] sm:$0xff]
    %v1984 = vld [vmem:[%s10] sm:$0x1]
    %v1986 = vlaneseq
    %v1987 = vshrl.u32 %v1986, 7
    %v1988 = vsub.s32 0, %v1987
    %v1989 = vrot.slane %v1984, %v1988
    %vm1991 = vcmask 261120
    %v1993 = vsel %vm1991, %v1979, 0
    %1995 = vmatprep.subr.mxu0 0.0
    %1996 = vmatpush1.msra.mxu0 %v1980
    %1997 = vmatprep.subr.mxu0 0.0
    %1998 = vmatpush1.msra.mxu0 %v1981
    %1999 = vmatprep.subr.mxu0 0.0
    %2000 = vmatpush1.msra.mxu0 %v1982
    %2001 = vmatprep.subr.mxu0 0.0
    %2002 = vmatpush1.msra.mxu0 %v1983
    %2003 = vmatprep.subr.mxu0 0.0
    %2004 = vmatpush1.msra.mxu0 0.0
    %2005 = vmatprep.subr.mxu0 0.0
    %2006 = vmatpush1.msra.mxu0 0.0
    %2007 = vmatprep.subr.mxu0 0.0
    %2008 = vmatpush1.msra.mxu0 0.0
    %2009 = vmatprep.subr.mxu0 0.0
    %2010 = vmatpush1.msra.mxu0 0.0
    %2011 = vmatprep.subr.mxu0 0.0
    %2012 = vmatpush1.msra.mxu0 0.0
    %2013 = vmatprep.subr.mxu0 0.0
    %2014 = vmatpush1.msra.mxu0 0.0
    %2015 = vmatprep.subr.mxu0 0.0
    %2016 = vmatpush1.msra.mxu0 0.0
    %2017 = vmatprep.subr.mxu0 0.0
    %2018 = vmatpush1.msra.mxu0 0.0
    %2019 = vmatprep.subr.mxu0 0.0
    %2020 = vmatpush1.msra.mxu0 0.0
    %2021 = vmatprep.subr.mxu0 0.0
    %2022 = vmatpush1.msra.mxu0 0.0
    %2023 = vmatprep.subr.mxu0 0.0
    %2024 = vmatpush1.msra.mxu0 0.0
    %2025 = vmatprep.subr.mxu0 0.0
    %2026 = vmatpush1.msra.mxu0 0.0
    %2027 = vmatprep.subr.mxu0 0.0
    %2028 = vmatpush1.msra.mxu0 0.0
    %2029 = vmatprep.subr.mxu0 0.0
    %2030 = vmatpush1.msra.mxu0 0.0
    %2031 = vmatprep.subr.mxu0 0.0
    %2032 = vmatpush1.msra.mxu0 0.0
    %2033 = vmatprep.subr.mxu0 0.0
    %2034 = vmatpush1.msra.mxu0 0.0
    %2035 = vmatprep.subr.mxu0 0.0
    %2036 = vmatpush1.msra.mxu0 0.0
    %2037 = vmatprep.subr.mxu0 0.0
    %2038 = vmatpush1.msra.mxu0 0.0
    %2039 = vmatprep.subr.mxu0 0.0
    %2040 = vmatpush1.msra.mxu0 0.0
    %2041 = vmatprep.subr.mxu0 0.0
    %2042 = vmatpush1.msra.mxu0 0.0
    %2043 = vmatprep.subr.mxu0 0.0
    %2044 = vmatpush1.msra.mxu0 0.0
    %2045 = vmatprep.subr.mxu0 0.0
    %2046 = vmatpush1.msra.mxu0 0.0
    %2047 = vmatprep.subr.mxu0 0.0
    %2048 = vmatpush1.msra.mxu0 0.0
    %2049 = vmatprep.subr.mxu0 0.0
    %2050 = vmatpush1.msra.mxu0 0.0
    %2051 = vmatprep.subr.mxu0 0.0
    %2052 = vmatpush1.msra.mxu0 0.0
    %2053 = vmatprep.subr.mxu0 0.0
    %2054 = vmatpush1.msra.mxu0 0.0
    %2055 = vmatprep.subr.mxu0 0.0
    %2056 = vmatpush1.msra.mxu0 0.0
    %2057 = vmatprep.subr.mxu0 0.0
    %2058 = vmatpush1.msra.mxu0 0.0
    %2059 = vmatprep.mubr.f32.mxu0 0.0
    %2060 = vmatmul.mubr.f32.gmra.mrb[0].mxu0 %v1993
    %v2061 = vpop.f32.mrb[0].mxu0
    %v2062 = vadd.f32 %v1989, %v2061
    %v2063 = vpop.f32.mrb[0].mxu0
    %2064 = vdwg.mxu0
    %v2065 = vld [vmem:[#allocation11] sm:$0xff]
    %v2066 = vld [vmem:[#allocation11 + $0x8] sm:$0xff]
    %v2067 = vld [vmem:[#allocation11 + $0x10] sm:$0xff]
    %v2068 = vld [vmem:[#allocation11 + $0x18] sm:$0xff]
    %v2069 = vld [vmem:[%s12] sm:$0x1]
    %v2071 = vlaneseq
    %v2072 = vshrl.u32 %v2071, 7
    %v2073 = vsub.s32 0, %v2072
    %v2074 = vrot.slane %v2069, %v2073
    %v2077 = vsel %vm1991, %v2062, 0
    %2079 = vmatprep.subr.mxu0 0.0
    %2080 = vmatpush1.msra.mxu0 %v2065
    %2081 = vmatprep.subr.mxu0 0.0
    %2082 = vmatpush1.msra.mxu0 %v2066
    %2083 = vmatprep.subr.mxu0 0.0
    %2084 = vmatpush1.msra.mxu0 %v2067
    %2085 = vmatprep.subr.mxu0 0.0
    %2086 = vmatpush1.msra.mxu0 %v2068
    %2087 = vmatprep.subr.mxu0 0.0
    %2088 = vmatpush1.msra.mxu0 0.0
    %2089 = vmatprep.subr.mxu0 0.0
    %2090 = vmatpush1.msra.mxu0 0.0
    %2091 = vmatprep.subr.mxu0 0.0
    %2092 = vmatpush1.msra.mxu0 0.0
    %2093 = vmatprep.subr.mxu0 0.0
    %2094 = vmatpush1.msra.mxu0 0.0
    %2095 = vmatprep.subr.mxu0 0.0
    %2096 = vmatpush1.msra.mxu0 0.0
    %2097 = vmatprep.subr.mxu0 0.0
    %2098 = vmatpush1.msra.mxu0 0.0
    %2099 = vmatprep.subr.mxu0 0.0
    %2100 = vmatpush1.msra.mxu0 0.0
    %2101 = vmatprep.subr.mxu0 0.0
    %2102 = vmatpush1.msra.mxu0 0.0
    %2103 = vmatprep.subr.mxu0 0.0
    %2104 = vmatpush1.msra.mxu0 0.0
    %2105 = vmatprep.subr.mxu0 0.0
    %2106 = vmatpush1.msra.mxu0 0.0
    %2107 = vmatprep.subr.mxu0 0.0
    %2108 = vmatpush1.msra.mxu0 0.0
    %2109 = vmatprep.subr.mxu0 0.0
    %2110 = vmatpush1.msra.mxu0 0.0
    %2111 = vmatprep.subr.mxu0 0.0
    %2112 = vmatpush1.msra.mxu0 0.0
    %2113 = vmatprep.subr.mxu0 0.0
    %2114 = vmatpush1.msra.mxu0 0.0
    %2115 = vmatprep.subr.mxu0 0.0
    %2116 = vmatpush1.msra.mxu0 0.0
    %2117 = vmatprep.subr.mxu0 0.0
    %2118 = vmatpush1.msra.mxu0 0.0
    %2119 = vmatprep.subr.mxu0 0.0
    %2120 = vmatpush1.msra.mxu0 0.0
    %2121 = vmatprep.subr.mxu0 0.0
    %2122 = vmatpush1.msra.mxu0 0.0
    %2123 = vmatprep.subr.mxu0 0.0
    %2124 = vmatpush1.msra.mxu0 0.0
    %2125 = vmatprep.subr.mxu0 0.0
    %2126 = vmatpush1.msra.mxu0 0.0
    %2127 = vmatprep.subr.mxu0 0.0
    %2128 = vmatpush1.msra.mxu0 0.0
    %2129 = vmatprep.subr.mxu0 0.0
    %2130 = vmatpush1.msra.mxu0 0.0
    %2131 = vmatprep.subr.mxu0 0.0
    %2132 = vmatpush1.msra.mxu0 0.0
    %2133 = vmatprep.subr.mxu0 0.0
    %2134 = vmatpush1.msra.mxu0 0.0
    %2135 = vmatprep.subr.mxu0 0.0
    %2136 = vmatpush1.msra.mxu0 0.0
    %2137 = vmatprep.subr.mxu0 0.0
    %2138 = vmatpush1.msra.mxu0 0.0
    %2139 = vmatprep.subr.mxu0 0.0
    %2140 = vmatpush1.msra.mxu0 0.0
    %2141 = vmatprep.subr.mxu0 0.0
    %2142 = vmatpush1.msra.mxu0 0.0
    %2143 = vmatprep.mubr.f32.mxu0 0.0
    %2144 = vmatmul.mubr.f32.gmra.mrb[0].mxu0 %v2077
    %v2145 = vpop.f32.mrb[0].mxu0
    %v2146 = vadd.f32 %v2074, %v2145
    %v2147 = vpop.f32.mrb[0].mxu0
    %2148 = vdwg.mxu0
    %v2149 = vtanh.pop %v2146
    %v2150 = vld [vmem:[%s13] sm:$0x1]
    %v2152 = vlaneseq
    %v2153 = vshrl.u32 %v2152, 7
    %v2154 = vsub.s32 0, %v2153
    %v2155 = vrot.slane %v2150, %v2154
    %v2157 = vmul.f32 %v2149, %v2155
    %vm2158 = vcmask 257024
    %v2159 = vsel %vm2158, %v2157, 0.0
    %2160 = vadd.xlane.f32.xlu0 %v2159
    %v2161 = vpop.xlane.xlu0 %2160
    %v2162 = vld [vmem:[#allocation2] sm:$0x1]
    %v2164 = vlaneseq
    %v2165 = vshrl.u32 %v2164, 7
    %v2166 = vsub.s32 0, %v2165
    %v2167 = vrot.slane %v2162, %v2166
    %v2169 = vadd.f32 %v2161, %v2167
    %vm2170 = vcmask 3072
    %2171 = vst.msk [vmem:[%s15] sm:$0xf] %vm2170, %v2169
    %2174 = vrot.lane.b32.xlu0 %v1790, 112
    %v2175 = vpop.permute.xlu0 %2174
    %2176 = vrot.lane.b32.xlu0 %v1791, 112
    %v2177 = vpop.permute.xlu0 %2176
    %v2180 = vadd.f32 %v1788, %v2175
    %v2181 = vadd.f32 %v1789, %v2177
    %2184 = vrot.lane.b32.xlu0 %v1792, 96
    %v2185 = vpop.permute.xlu0 %2184
    %2186 = vrot.lane.b32.xlu0 %v1793, 96
    %v2187 = vpop.permute.xlu0 %2186
    %v2190 = vadd.f32 %v2180, %v2185
    %v2191 = vadd.f32 %v2181, %v2187
    %2194 = vrot.lane.b32.xlu0 %v1794, 80
    %v2195 = vpop.permute.xlu0 %2194
    %2196 = vrot.lane.b32.xlu0 %v1795, 80
    %v2197 = vpop.permute.xlu0 %2196
    %v2200 = vadd.f32 %v2190, %v2195
    %v2201 = vadd.f32 %v2191, %v2197
    %v2202 = vmul.f32 %v2200, 0.0625
    %v2203 = vmul.f32 %v2201, 0.0625
    %2204 = vst.msk [vmem:[#allocation12] sm:$0xff] %vm1976, %v2202
    %2205 = vst.msk [vmem:[#allocation12 + $0x8] sm:$0xff] %vm1976, %v2203
    // Predicated region
    $region82: #{tpu_custom_call.1} parent=1 // pred_check
      _
    $region83: #{tpu_custom_call.1} parent=1 // pred_check_branch
      %2207 = sbr.rel (0) target = $region85
    $region84: #{tpu_custom_call.1} parent=1 // pred_region
      _
    $region85: #{tpu_custom_call.1} parent=1 // pred_fallthru
      _
    // Predicated region
    $region86: #{tpu_custom_call.1} parent=1 // pred_check
      _
    $region87: #{tpu_custom_call.1} parent=1 // pred_check_branch
      %2209 = sbr.rel (0) target = $region89
    $region88: #{tpu_custom_call.1} parent=1 // pred_region
      %s2211 = ssub.s32 256, 256
      %2212 = vsyncadd [#allocation5], %s2211
      %s2213 = sshll.u32 [#allocation12], 4
      %s2214 = int_to_ptr.vmem [resolvable:$true] %s2213
      %2219 = dma.vmem_to_hbm [thread:$0]  %s2214, 256, %s16, [#allocation5], 128, 128, 8
    $region89: #{tpu_custom_call.1} parent=1 // pred_fallthru
      _
    // Predicated region
    $region90: #{tpu_custom_call.1} parent=1 // pred_check
      _
    $region91: #{tpu_custom_call.1} parent=1 // pred_check_branch
      %2221 = sbr.rel (0) target = $region93
    $region92: #{tpu_custom_call.1} parent=1 // pred_region
      _
    $region93: #{tpu_custom_call.1} parent=1 // pred_fallthru
      _
    // Predicated region
    $region94: #{tpu_custom_call.1} parent=1 // pred_check
      _
    $region95: #{tpu_custom_call.1} parent=1 // pred_check_branch
      %2223 = sbr.rel (0) target = $region97
    $region96: #{tpu_custom_call.1} parent=1 // pred_region
      %2224 = dma.done [#allocation5], 256
    $region97: #{tpu_custom_call.1} parent=1 // pred_fallthru
      _
    %2225 = vsyncpa [#allocation4], 1
    %2226 = vsyncpa [#allocation7], 1
    %2227 = vsyncpa [#allocation10], 1
    %2228 = vsyncpa [#allocation5], 1

</llo_original>
